<compile_context>
chip_gen: v6e
topology: v6e:2x2x1
jax: 0.10.0
libtpu: 0.0.40
codegen_flags: <defaults>
</compile_context>

<pallas_src>
import jax
import jax.numpy as jnp
from jax.experimental import pallas as pl
from jax.experimental.pallas import tpu as pltpu

IN_DIM = 512
HID_DIM = 512
OUT_DIM = 10
OUT_PAD = 128  # lane-dense padded logits width


def _mlp_kernel(h_ref, w1_ref, b1_ref, w2_ref, b2_ref, w3_ref, b3_ref, o_ref):
    # h_ref: (tm, 512) f32 tile of the input batch; cast to bf16 inside the kernel
    # (fuses the convert into the pipelined stream instead of a separate XLA pass).
    x = h_ref[...].astype(jnp.bfloat16)

    # Linear(512, 512) + ReLU — bf16 MXU matmul, f32 accumulate, bf16 ReLU epilogue.
    a1 = jnp.dot(x, w1_ref[...], preferred_element_type=jnp.float32) + b1_ref[...]
    y1 = jnp.maximum(a1.astype(jnp.bfloat16), 0.0)

    # Linear(512, 512) + ReLU
    a2 = jnp.dot(y1, w2_ref[...], preferred_element_type=jnp.float32) + b2_ref[...]
    y2 = jnp.maximum(a2.astype(jnp.bfloat16), 0.0)

    # Linear(512, 128-padded) — real logits live in lanes 0..9; lanes 10..127 are exact
    # zeros (zero weight columns, zero bias) and are sliced off by the wrapper.
    y3 = jnp.dot(y2, w3_ref[...], preferred_element_type=jnp.float32) + b3_ref[...]
    o_ref[...] = y3.astype(o_ref.dtype)


def _round_up(x, m):
    return (x + m - 1) // m * m


def _pick_tile(B):
    """Batch tile selection: big tiles to amortize the ~0.35us/step pipeline overhead,
    but >= 2 (even-count) tiles for larger batches so v7x's two TensorCores both work."""
    if B <= 256:
        return max(8, _round_up(B, 8))                 # single small tile, minimal padding
    return min(1024, _round_up(pl.cdiv(B, 2), 256))    # >= 2 tiles, each a multiple of 256


def label_predictor(h, params, *, tm=None):
    """Forward pass of LabelPredictor. h: [B, 512] float32 -> [B, 10] float32."""
    w1, b1, w2, b2, w3, b3 = params
    B, D = h.shape
    assert D == IN_DIM

    if tm is None:
        tm = _pick_tile(B)

    # Pad the batch up to a multiple of the tile so the grid covers it exactly.
    n_tiles = pl.cdiv(B, tm)
    Bp = n_tiles * tm
    if Bp != B:
        h = jnp.pad(h, ((0, Bp - B), (0, 0)))

    # Pad the last layer to a lane-dense 128-wide output slab.
    w3p = jnp.pad(w3, ((0, 0), (0, OUT_PAD - OUT_DIM)))
    b3p = jnp.pad(b3, ((0, 0), (0, OUT_PAD - OUT_DIM)))

    # Weights as bf16 MXU operands (tiny, resident); biases stay f32 (added to f32 acc).
    w1b = w1.astype(jnp.bfloat16)
    w2b = w2.astype(jnp.bfloat16)
    w3b = w3p.astype(jnp.bfloat16)

    flops = (2 * Bp * IN_DIM * HID_DIM
             + 2 * Bp * HID_DIM * HID_DIM
             + 2 * Bp * HID_DIM * OUT_PAD)
    bytes_accessed = (
        Bp * IN_DIM * 4                                                   # streamed h (f32)
        + (IN_DIM * HID_DIM + HID_DIM * HID_DIM + HID_DIM * OUT_PAD) * 2  # weights (bf16)
        + (HID_DIM + HID_DIM + OUT_PAD) * 4                               # biases (f32)
        + Bp * OUT_PAD * 4                                                # output (f32)
    )

    out = pl.pallas_call(
        _mlp_kernel,
        out_shape=jax.ShapeDtypeStruct((Bp, OUT_PAD), jnp.float32),
        grid_spec=pltpu.PrefetchScalarGridSpec(
            num_scalar_prefetch=0,
            grid=(n_tiles,),
            in_specs=[
                pl.BlockSpec((tm, IN_DIM), lambda i: (i, 0)),           # h tile (streamed, f32)
                pl.BlockSpec((IN_DIM, HID_DIM), lambda i: (0, 0)),      # W1 (full, resident)
                pl.BlockSpec((1, HID_DIM), lambda i: (0, 0)),           # b1
                pl.BlockSpec((HID_DIM, HID_DIM), lambda i: (0, 0)),     # W2 (full, resident)
                pl.BlockSpec((1, HID_DIM), lambda i: (0, 0)),           # b2
                pl.BlockSpec((HID_DIM, OUT_PAD), lambda i: (0, 0)),     # W3 (padded, resident)
                pl.BlockSpec((1, OUT_PAD), lambda i: (0, 0)),           # b3 (padded)
            ],
            out_specs=pl.BlockSpec((tm, OUT_PAD), lambda i: (i, 0)),    # lane-dense logits slab
        ),
        compiler_params=pltpu.CompilerParams(
            dimension_semantics=("parallel",),                          # batch axis shards across TCs
            vmem_limit_bytes=(48 << 20) if tm > 1024 else None,         # only needed when sweeping tm up
        ),
        cost_estimate=pl.CostEstimate(
            flops=flops, transcendentals=0, bytes_accessed=bytes_accessed
        ),
    )(h, w1b, b1, w2b, b2, w3b, b3p)

    return out[:B, :OUT_DIM]


def init_params(key):
    """Deterministic init mimicking nn.Linear default U(-1/sqrt(fan_in), 1/sqrt(fan_in)).
    Weights are stored as [in_features, out_features] (transposed vs. PyTorch)."""
    ks = jax.random.split(key, 6)

    def linear(kw, kb, fan_in, fan_out):
        bound = 1.0 / (fan_in ** 0.5)
        w = jax.random.uniform(kw, (fan_in, fan_out), jnp.float32, -bound, bound)
        b = jax.random.uniform(kb, (1, fan_out), jnp.float32, -bound, bound)
        return w, b

    w1, b1 = linear(ks[0], ks[1], IN_DIM, HID_DIM)
    w2, b2 = linear(ks[2], ks[3], HID_DIM, HID_DIM)
    w3, b3 = linear(ks[4], ks[5], HID_DIM, OUT_DIM)
    return (w1, b1, w2, b2, w3, b3)


def label_predictor_ref(h, params):
    """Pure-JAX reference with the same bf16-operand / f32-accumulate / bf16-ReLU numerics."""
    w1, b1, w2, b2, w3, b3 = params
    x = h.astype(jnp.bfloat16)
    a1 = jnp.dot(x, w1.astype(jnp.bfloat16), preferred_element_type=jnp.float32) + b1
    y1 = jnp.maximum(a1.astype(jnp.bfloat16), 0.0)
    a2 = jnp.dot(y1, w2.astype(jnp.bfloat16), preferred_element_type=jnp.float32) + b2
    y2 = jnp.maximum(a2.astype(jnp.bfloat16), 0.0)
    return jnp.dot(y2, w3.astype(jnp.bfloat16), preferred_element_type=jnp.float32) + b3


if __name__ == "__main__":
    key = jax.random.PRNGKey(0)
    k_h, k_p = jax.random.split(key)

    B = 32  # small demo batch; wrapper rounds the tile to the sublane multiple internally
    h = jax.random.normal(k_h, (B, IN_DIM), dtype=jnp.float32)
    params = init_params(k_p)

    out = label_predictor(h, params)
    out = jax.block_until_ready(out)

    ref = label_predictor_ref(h, params)
    assert out.shape == (B, OUT_DIM)
    assert jnp.allclose(out, ref, atol=1e-2, rtol=1e-2), "mismatch vs JAX reference"

    print("KERNEL_OK")
</pallas_src>

<mosaic_0001>
module attributes {stable_mosaic.version = 11 : i64} {
  func.func @_mlp_kernel(%arg0: i32, %arg1: memref<32x512xf32, #tpu.memory_space<vmem>>, %arg2: memref<512x512xbf16, #tpu.memory_space<vmem>>, %arg3: memref<1x512xf32, #tpu.memory_space<vmem>>, %arg4: memref<512x512xbf16, #tpu.memory_space<vmem>>, %arg5: memref<1x512xf32, #tpu.memory_space<vmem>>, %arg6: memref<512x128xbf16, #tpu.memory_space<vmem>>, %arg7: memref<1x128xf32, #tpu.memory_space<vmem>>, %arg8: memref<32x128xf32, #tpu.memory_space<vmem>>) attributes {dimension_semantics = [#tpu.dimension_semantics<parallel>], iteration_bounds = array<i64: 1>, scalar_prefetch = 0 : i64, scratch_operands = 0 : i64, tpu.core_type = #tpu.core_type<tc>, window_params = [{transform_indices = @transform_0, window_bounds = array<i64: 32, 512>}, {pipeline_mode = #tpu.pipeline_mode<synchronous>, transform_indices = @transform_1, window_bounds = array<i64: 512, 512>}, {pipeline_mode = #tpu.pipeline_mode<synchronous>, transform_indices = @transform_2, window_bounds = array<i64: 1, 512>}, {pipeline_mode = #tpu.pipeline_mode<synchronous>, transform_indices = @transform_3, window_bounds = array<i64: 512, 512>}, {pipeline_mode = #tpu.pipeline_mode<synchronous>, transform_indices = @transform_4, window_bounds = array<i64: 1, 512>}, {pipeline_mode = #tpu.pipeline_mode<synchronous>, transform_indices = @transform_5, window_bounds = array<i64: 512, 128>}, {pipeline_mode = #tpu.pipeline_mode<synchronous>, transform_indices = @transform_6, window_bounds = array<i64: 1, 128>}, {transform_indices = @transform_7, window_bounds = array<i64: 32, 128>}]} {
    %c0 = arith.constant 0 : index
    %c0_0 = arith.constant 0 : index
    %0 = vector.load %arg1[%c0, %c0_0] : memref<32x512xf32, #tpu.memory_space<vmem>>, vector<32x512xf32>
    %1 = arith.truncf %0 : vector<32x512xf32> to vector<32x512xbf16>
    %c0_1 = arith.constant 0 : index
    %c0_2 = arith.constant 0 : index
    %2 = vector.load %arg2[%c0_1, %c0_2] : memref<512x512xbf16, #tpu.memory_space<vmem>>, vector<512x512xbf16>
    %cst = arith.constant dense<0.000000e+00> : vector<32x512xf32>
    %3 = tpu.matmul %1, %2, %cst {dimension_numbers = #tpu.dot_dimension_numbers<[1], [0], [0], [1], [0, 0, 1, 1], [], []>} : vector<32x512xbf16>, vector<512x512xbf16>, vector<32x512xf32> -> vector<32x512xf32>
    %c0_3 = arith.constant 0 : index
    %c0_4 = arith.constant 0 : index
    %4 = vector.load %arg3[%c0_3, %c0_4] : memref<1x512xf32, #tpu.memory_space<vmem>>, vector<1x512xf32>
    %5 = vector.broadcast %4 : vector<1x512xf32> to vector<32x512xf32>
    %6 = arith.addf %3, %5 : vector<32x512xf32>
    %7 = arith.truncf %6 : vector<32x512xf32> to vector<32x512xbf16>
    %cst_5 = arith.constant 0.000000e+00 : bf16
    %8 = vector.broadcast %cst_5 : bf16 to vector<32x512xbf16>
    %9 = arith.maximumf %7, %8 : vector<32x512xbf16>
    %c0_6 = arith.constant 0 : index
    %c0_7 = arith.constant 0 : index
    %10 = vector.load %arg4[%c0_6, %c0_7] : memref<512x512xbf16, #tpu.memory_space<vmem>>, vector<512x512xbf16>
    %cst_8 = arith.constant dense<0.000000e+00> : vector<32x512xf32>
    %11 = tpu.matmul %9, %10, %cst_8 {dimension_numbers = #tpu.dot_dimension_numbers<[1], [0], [0], [1], [0, 0, 1, 1], [], []>} : vector<32x512xbf16>, vector<512x512xbf16>, vector<32x512xf32> -> vector<32x512xf32>
    %c0_9 = arith.constant 0 : index
    %c0_10 = arith.constant 0 : index
    %12 = vector.load %arg5[%c0_9, %c0_10] : memref<1x512xf32, #tpu.memory_space<vmem>>, vector<1x512xf32>
    %13 = vector.broadcast %12 : vector<1x512xf32> to vector<32x512xf32>
    %14 = arith.addf %11, %13 : vector<32x512xf32>
    %15 = arith.truncf %14 : vector<32x512xf32> to vector<32x512xbf16>
    %cst_11 = arith.constant 0.000000e+00 : bf16
    %16 = vector.broadcast %cst_11 : bf16 to vector<32x512xbf16>
    %17 = arith.maximumf %15, %16 : vector<32x512xbf16>
    %c0_12 = arith.constant 0 : index
    %c0_13 = arith.constant 0 : index
    %18 = vector.load %arg6[%c0_12, %c0_13] : memref<512x128xbf16, #tpu.memory_space<vmem>>, vector<512x128xbf16>
    %cst_14 = arith.constant dense<0.000000e+00> : vector<32x128xf32>
    %19 = tpu.matmul %17, %18, %cst_14 {dimension_numbers = #tpu.dot_dimension_numbers<[1], [0], [0], [1], [0, 0, 1, 1], [], []>} : vector<32x512xbf16>, vector<512x128xbf16>, vector<32x128xf32> -> vector<32x128xf32>
    %c0_15 = arith.constant 0 : index
    %c0_16 = arith.constant 0 : index
    %20 = vector.load %arg7[%c0_15, %c0_16] : memref<1x128xf32, #tpu.memory_space<vmem>>, vector<1x128xf32>
    %21 = vector.broadcast %20 : vector<1x128xf32> to vector<32x128xf32>
    %22 = arith.addf %19, %21 : vector<32x128xf32>
    %c0_17 = arith.constant 0 : index
    %c0_18 = arith.constant 0 : index
    %23 = vector.load %arg8[%c0_17, %c0_18] : memref<32x128xf32, #tpu.memory_space<vmem>>, vector<32x128xf32>
    tpu.vector_store %arg8[%c0_17, %c0_18], %22 {strides = array<i32>} : memref<32x128xf32, #tpu.memory_space<vmem>>, vector<32x128xf32>,
    return
  }
  func.func @transform_0(%arg0: i32) -> (i32, i32) {
    %c0_i32 = arith.constant 0 : i32
    %c0_i32_0 = arith.constant 0 : i32
    return %arg0, %c0_i32 : i32, i32
  }
  func.func @transform_1(%arg0: i32) -> (i32, i32) {
    %c0_i32 = arith.constant 0 : i32
    %c0_i32_0 = arith.constant 0 : i32
    %c0_i32_1 = arith.constant 0 : i32
    return %c0_i32, %c0_i32_0 : i32, i32
  }
  func.func @transform_2(%arg0: i32) -> (i32, i32) {
    %c0_i32 = arith.constant 0 : i32
    %c0_i32_0 = arith.constant 0 : i32
    %c0_i32_1 = arith.constant 0 : i32
    return %c0_i32, %c0_i32_0 : i32, i32
  }
  func.func @transform_3(%arg0: i32) -> (i32, i32) {
    %c0_i32 = arith.constant 0 : i32
    %c0_i32_0 = arith.constant 0 : i32
    %c0_i32_1 = arith.constant 0 : i32
    return %c0_i32, %c0_i32_0 : i32, i32
  }
  func.func @transform_4(%arg0: i32) -> (i32, i32) {
    %c0_i32 = arith.constant 0 : i32
    %c0_i32_0 = arith.constant 0 : i32
    %c0_i32_1 = arith.constant 0 : i32
    return %c0_i32, %c0_i32_0 : i32, i32
  }
  func.func @transform_5(%arg0: i32) -> (i32, i32) {
    %c0_i32 = arith.constant 0 : i32
    %c0_i32_0 = arith.constant 0 : i32
    %c0_i32_1 = arith.constant 0 : i32
    return %c0_i32, %c0_i32_0 : i32, i32
  }
  func.func @transform_6(%arg0: i32) -> (i32, i32) {
    %c0_i32 = arith.constant 0 : i32
    %c0_i32_0 = arith.constant 0 : i32
    %c0_i32_1 = arith.constant 0 : i32
    return %c0_i32, %c0_i32_0 : i32, i32
  }
  func.func @transform_7(%arg0: i32) -> (i32, i32) {
    %c0_i32 = arith.constant 0 : i32
    %c0_i32_0 = arith.constant 0 : i32
    return %arg0, %c0_i32 : i32, i32
  }
}

</mosaic_0001>

<llo_original>
// kernel: tpu_custom_call.1
$region0: #{tpu_custom_call.1}
  #allocation0 [shape = 'u32[]', space=smem, size = 0x4, offset = 0x4, fixed_abs, tag = 'smem constant byte address 0x4 - core index']
  #allocation1 [shape = 'u32[144,128]{1,0:T(1,128)}', space=vmem, size = 0x12000, scoped, tag = 'internal scratch']
  %s0 = inlined_call_operand.hbm [shape: f32[32,512], index: 0, kind: input, shape index: {}]
  %s1 = inlined_call_operand.hbm [shape: bf16[512,512], index: 1, kind: input, shape index: {}]
  %s2 = inlined_call_operand.hbm [shape: f32[1,512], index: 2, kind: input, shape index: {}]
  %s3 = inlined_call_operand.hbm [shape: bf16[512,512], index: 3, kind: input, shape index: {}]
  %s4 = inlined_call_operand.vmem [shape: f32[1,512], index: 4, kind: input, shape index: {}]
  %s5 = inlined_call_operand.hbm [shape: bf16[512,128], index: 5, kind: input, shape index: {}]
  %s6 = inlined_call_operand.vmem [shape: f32[1,128], index: 6, kind: input, shape index: {}]
  %s7 = inlined_call_operand.hbm [shape: f32[32,128], index: 7, kind: output, shape index: {}]
  %s8 = sld [smem:[#allocation0]]
  $region58: #{tpu_custom_call.1} parent=0
    _
  %s10 = ssub.s32 1, %s8
  %s11 = scalar_select 0, %s10, %s8
  $region1: #{tpu_custom_call.1} parent=0
    #allocation2 [shape = 'u8[65536]{0}', space=vmem, size = 0x10000, scoped, tag = 'input window, operand 0, single buffered']
    #allocation3 [shape = 's32[1]{0}', space=sflag, size = 0x4, scoped, tag = 'scoped memory for tpu_custom_call.1']
    #allocation4 [shape = 's32[1]{0}', space=sflag, size = 0x4, scoped, tag = 'scoped memory for tpu_custom_call.1']
    #allocation5 [shape = 'u8[524288]{0}', space=vmem, size = 0x80000, scoped, tag = 'input window, operand 1, single buffered']
    #allocation6 [shape = 's32[1]{0}', space=sflag, size = 0x4, scoped, tag = 'scoped memory for tpu_custom_call.1']
    #allocation7 [shape = 'u8[2048]{0}', space=vmem, size = 0x800, scoped, tag = 'input window, operand 2, single buffered']
    #allocation8 [shape = 'u8[524288]{0}', space=vmem, size = 0x80000, scoped, tag = 'input window, operand 3, single buffered']
    #allocation9 [shape = 's32[1]{0}', space=sflag, size = 0x4, scoped, tag = 'scoped memory for tpu_custom_call.1']
    #allocation10 [shape = 'u8[131072]{0}', space=vmem, size = 0x20000, scoped, tag = 'input window, operand 5, single buffered']
    #allocation11 [shape = 'u8[16384]{0}', space=vmem, size = 0x4000, scoped, tag = 'output window, operand 0, single buffered']
    %12 = vsyncpa [#allocation3], 0
    %13 = vsyncpa [#allocation6], 0
    %14 = vsyncpa [#allocation9], 0
    %15 = vsyncpa [#allocation4], 0
    // Predicated region
    $region2: #{tpu_custom_call.1} parent=1 // pred_check
      _
    $region3: #{tpu_custom_call.1} parent=1 // pred_check_branch
      %17 = sbr.rel (0) target = $region5
    $region4: #{tpu_custom_call.1} parent=1 // pred_region
      %s19 = ssub.s32 2048, 2048
      %20 = vsyncadd [#allocation3], %s19
      %s21 = sshll.u32 [#allocation2], 4
      %s22 = int_to_ptr.vmem [resolvable:$true] %s21
      %27 = dma.hbm_to_vmem [thread:$0]  %s0, 2048, %s22, [#allocation3], 512, 512, 32
    $region5: #{tpu_custom_call.1} parent=1 // pred_fallthru
      _
    // Predicated region
    $region6: #{tpu_custom_call.1} parent=1 // pred_check
      _
    $region7: #{tpu_custom_call.1} parent=1 // pred_check_branch
      %29 = sbr.rel (0) target = $region9
    $region8: #{tpu_custom_call.1} parent=1 // pred_region
      %s31 = ssub.s32 16384, 16384
      %32 = vsyncadd [#allocation6], %s31
      %s33 = sshll.u32 [#allocation5], 4
      %s34 = int_to_ptr.vmem [resolvable:$true] %s33
      %39 = dma.hbm_to_vmem [thread:$0]  %s1, 16384, %s34, [#allocation6], 256, 256, 16
    $region9: #{tpu_custom_call.1} parent=1 // pred_fallthru
      _
    // Predicated region
    $region10: #{tpu_custom_call.1} parent=1 // pred_check
      _
    $region11: #{tpu_custom_call.1} parent=1 // pred_check_branch
      %41 = sbr.rel (0) target = $region13
    $region12: #{tpu_custom_call.1} parent=1 // pred_region
      %s43 = ssub.s32 64, 64
      %44 = vsyncadd [#allocation6], %s43
      %s46 = sshll.u32 [#allocation7], 4
      %s47 = int_to_ptr.vmem [resolvable:$true] %s46
      %49 = dma.hbm_to_vmem [thread:$0]  %s2, 64, %s47, [#allocation6]
    $region13: #{tpu_custom_call.1} parent=1 // pred_fallthru
      _
    // Predicated region
    $region14: #{tpu_custom_call.1} parent=1 // pred_check
      _
    $region15: #{tpu_custom_call.1} parent=1 // pred_check_branch
      %51 = sbr.rel (0) target = $region17
    $region16: #{tpu_custom_call.1} parent=1 // pred_region
      %s53 = ssub.s32 16384, 16384
      %54 = vsyncadd [#allocation9], %s53
      %s55 = sshll.u32 [#allocation8], 4
      %s56 = int_to_ptr.vmem [resolvable:$true] %s55
      %61 = dma.hbm_to_vmem [thread:$0]  %s3, 16384, %s56, [#allocation9], 256, 256, 16
    $region17: #{tpu_custom_call.1} parent=1 // pred_fallthru
      _
    // Predicated region
    $region18: #{tpu_custom_call.1} parent=1 // pred_check
      _
    $region19: #{tpu_custom_call.1} parent=1 // pred_check_branch
      %63 = sbr.rel (0) target = $region21
    $region20: #{tpu_custom_call.1} parent=1 // pred_region
      _
    $region21: #{tpu_custom_call.1} parent=1 // pred_fallthru
      _
    // Predicated region
    $region22: #{tpu_custom_call.1} parent=1 // pred_check
      _
    $region23: #{tpu_custom_call.1} parent=1 // pred_check_branch
      %65 = sbr.rel (0) target = $region25
    $region24: #{tpu_custom_call.1} parent=1 // pred_region
      %s67 = ssub.s32 4096, 4096
      %68 = vsyncadd [#allocation9], %s67
      %s69 = sshll.u32 [#allocation10], 4
      %s70 = int_to_ptr.vmem [resolvable:$true] %s69
      %75 = dma.hbm_to_vmem [thread:$0]  %s5, 4096, %s70, [#allocation9], 64, 64, 4
    $region25: #{tpu_custom_call.1} parent=1 // pred_fallthru
      _
    // Predicated region
    $region26: #{tpu_custom_call.1} parent=1 // pred_check
      _
    $region27: #{tpu_custom_call.1} parent=1 // pred_check_branch
      %77 = sbr.rel (0) target = $region29
    $region28: #{tpu_custom_call.1} parent=1 // pred_region
      _
    $region29: #{tpu_custom_call.1} parent=1 // pred_fallthru
      _
    // Predicated region
    $region30: #{tpu_custom_call.1} parent=1 // pred_check
      _
    $region31: #{tpu_custom_call.1} parent=1 // pred_check_branch
      %79 = sbr.rel (0) target = $region33
    $region32: #{tpu_custom_call.1} parent=1 // pred_region
      %80 = dma.done [#allocation3], 2048
    $region33: #{tpu_custom_call.1} parent=1 // pred_fallthru
      _
    // Predicated region
    $region34: #{tpu_custom_call.1} parent=1 // pred_check
      _
    $region35: #{tpu_custom_call.1} parent=1 // pred_check_branch
      %82 = sbr.rel (0) target = $region37
    $region36: #{tpu_custom_call.1} parent=1 // pred_region
      %83 = dma.done [#allocation6], 16384
    $region37: #{tpu_custom_call.1} parent=1 // pred_fallthru
      _
    // Predicated region
    $region38: #{tpu_custom_call.1} parent=1 // pred_check
      _
    $region39: #{tpu_custom_call.1} parent=1 // pred_check_branch
      %85 = sbr.rel (0) target = $region41
    $region40: #{tpu_custom_call.1} parent=1 // pred_region
      %86 = dma.done [#allocation6], 64
    $region41: #{tpu_custom_call.1} parent=1 // pred_fallthru
      _
    // Predicated region
    $region42: #{tpu_custom_call.1} parent=1 // pred_check
      _
    $region43: #{tpu_custom_call.1} parent=1 // pred_check_branch
      %88 = sbr.rel (0) target = $region45
    $region44: #{tpu_custom_call.1} parent=1 // pred_region
      %89 = dma.done [#allocation9], 16384
    $region45: #{tpu_custom_call.1} parent=1 // pred_fallthru
      _
    // Predicated region
    $region46: #{tpu_custom_call.1} parent=1 // pred_check
      _
    $region47: #{tpu_custom_call.1} parent=1 // pred_check_branch
      %91 = sbr.rel (0) target = $region49
    $region48: #{tpu_custom_call.1} parent=1 // pred_region
      %92 = dma.done [#allocation9], 4096
    $region49: #{tpu_custom_call.1} parent=1 // pred_fallthru
      _
    %v94 = vld [vmem:[#allocation2] sm:$0xff]
    %v95 = vld [vmem:[#allocation2 + $0x8] sm:$0xff]
    %v96 = vld [vmem:[#allocation2 + $0x10] sm:$0xff]
    %v97 = vld [vmem:[#allocation2 + $0x18] sm:$0xff]
    %v98 = vld [vmem:[#allocation2 + $0x20] sm:$0xff]
    %v99 = vld [vmem:[#allocation2 + $0x28] sm:$0xff]
    %v100 = vld [vmem:[#allocation2 + $0x30] sm:$0xff]
    %v101 = vld [vmem:[#allocation2 + $0x38] sm:$0xff]
    %v102 = vld [vmem:[#allocation2 + $0x40] sm:$0xff]
    %v103 = vld [vmem:[#allocation2 + $0x48] sm:$0xff]
    %v104 = vld [vmem:[#allocation2 + $0x50] sm:$0xff]
    %v105 = vld [vmem:[#allocation2 + $0x58] sm:$0xff]
    %v106 = vld [vmem:[#allocation2 + $0x60] sm:$0xff]
    %v107 = vld [vmem:[#allocation2 + $0x68] sm:$0xff]
    %v108 = vld [vmem:[#allocation2 + $0x70] sm:$0xff]
    %v109 = vld [vmem:[#allocation2 + $0x78] sm:$0xff]
    %v110 = vpack.c.bf16 %v98, %v94
    %v111 = vpack.c.bf16 %v99, %v95
    %v112 = vpack.c.bf16 %v100, %v96
    %v113 = vpack.c.bf16 %v101, %v97
    %v114 = vpack.c.bf16 %v106, %v102
    %v115 = vpack.c.bf16 %v107, %v103
    %v116 = vpack.c.bf16 %v108, %v104
    %v117 = vpack.c.bf16 %v109, %v105
    %v118 = vld [vmem:[#allocation5] sm:$0xff]
    %v119 = vld [vmem:[#allocation5 + $0x8] sm:$0xff]
    %v120 = vld [vmem:[#allocation5 + $0x10] sm:$0xff]
    %v121 = vld [vmem:[#allocation5 + $0x18] sm:$0xff]
    %v122 = vld [vmem:[#allocation5 + $0x20] sm:$0xff]
    %v123 = vld [vmem:[#allocation5 + $0x28] sm:$0xff]
    %v124 = vld [vmem:[#allocation5 + $0x30] sm:$0xff]
    %v125 = vld [vmem:[#allocation5 + $0x38] sm:$0xff]
    %v126 = vld [vmem:[#allocation5 + $0x40] sm:$0xff]
    %v127 = vld [vmem:[#allocation5 + $0x48] sm:$0xff]
    %v128 = vld [vmem:[#allocation5 + $0x50] sm:$0xff]
    %v129 = vld [vmem:[#allocation5 + $0x58] sm:$0xff]
    %v130 = vld [vmem:[#allocation5 + $0x60] sm:$0xff]
    %v131 = vld [vmem:[#allocation5 + $0x68] sm:$0xff]
    %v132 = vld [vmem:[#allocation5 + $0x70] sm:$0xff]
    %v133 = vld [vmem:[#allocation5 + $0x78] sm:$0xff]
    %v134 = vld [vmem:[#allocation5 + $0x80] sm:$0xff]
    %v135 = vld [vmem:[#allocation5 + $0x88] sm:$0xff]
    %v136 = vld [vmem:[#allocation5 + $0x90] sm:$0xff]
    %v137 = vld [vmem:[#allocation5 + $0x98] sm:$0xff]
    %v138 = vld [vmem:[#allocation5 + $0xa0] sm:$0xff]
    %v139 = vld [vmem:[#allocation5 + $0xa8] sm:$0xff]
    %v140 = vld [vmem:[#allocation5 + $0xb0] sm:$0xff]
    %v141 = vld [vmem:[#allocation5 + $0xb8] sm:$0xff]
    %v142 = vld [vmem:[#allocation5 + $0xc0] sm:$0xff]
    %v143 = vld [vmem:[#allocation5 + $0xc8] sm:$0xff]
    %v144 = vld [vmem:[#allocation5 + $0xd0] sm:$0xff]
    %v145 = vld [vmem:[#allocation5 + $0xd8] sm:$0xff]
    %v146 = vld [vmem:[#allocation5 + $0xe0] sm:$0xff]
    %v147 = vld [vmem:[#allocation5 + $0xe8] sm:$0xff]
    %v148 = vld [vmem:[#allocation5 + $0xf0] sm:$0xff]
    %v149 = vld [vmem:[#allocation5 + $0xf8] sm:$0xff]
    %v150 = vld [vmem:[#allocation5 + $0x100] sm:$0xff]
    %v151 = vld [vmem:[#allocation5 + $0x108] sm:$0xff]
    %v152 = vld [vmem:[#allocation5 + $0x110] sm:$0xff]
    %v153 = vld [vmem:[#allocation5 + $0x118] sm:$0xff]
    %v154 = vld [vmem:[#allocation5 + $0x120] sm:$0xff]
    %v155 = vld [vmem:[#allocation5 + $0x128] sm:$0xff]
    %v156 = vld [vmem:[#allocation5 + $0x130] sm:$0xff]
    %v157 = vld [vmem:[#allocation5 + $0x138] sm:$0xff]
    %v158 = vld [vmem:[#allocation5 + $0x140] sm:$0xff]
    %v159 = vld [vmem:[#allocation5 + $0x148] sm:$0xff]
    %v160 = vld [vmem:[#allocation5 + $0x150] sm:$0xff]
    %v161 = vld [vmem:[#allocation5 + $0x158] sm:$0xff]
    %v162 = vld [vmem:[#allocation5 + $0x160] sm:$0xff]
    %v163 = vld [vmem:[#allocation5 + $0x168] sm:$0xff]
    %v164 = vld [vmem:[#allocation5 + $0x170] sm:$0xff]
    %v165 = vld [vmem:[#allocation5 + $0x178] sm:$0xff]
    %v166 = vld [vmem:[#allocation5 + $0x180] sm:$0xff]
    %v167 = vld [vmem:[#allocation5 + $0x188] sm:$0xff]
    %v168 = vld [vmem:[#allocation5 + $0x190] sm:$0xff]
    %v169 = vld [vmem:[#allocation5 + $0x198] sm:$0xff]
    %v170 = vld [vmem:[#allocation5 + $0x1a0] sm:$0xff]
    %v171 = vld [vmem:[#allocation5 + $0x1a8] sm:$0xff]
    %v172 = vld [vmem:[#allocation5 + $0x1b0] sm:$0xff]
    %v173 = vld [vmem:[#allocation5 + $0x1b8] sm:$0xff]
    %v174 = vld [vmem:[#allocation5 + $0x1c0] sm:$0xff]
    %v175 = vld [vmem:[#allocation5 + $0x1c8] sm:$0xff]
    %v176 = vld [vmem:[#allocation5 + $0x1d0] sm:$0xff]
    %v177 = vld [vmem:[#allocation5 + $0x1d8] sm:$0xff]
    %v178 = vld [vmem:[#allocation5 + $0x1e0] sm:$0xff]
    %v179 = vld [vmem:[#allocation5 + $0x1e8] sm:$0xff]
    %v180 = vld [vmem:[#allocation5 + $0x1f0] sm:$0xff]
    %v181 = vld [vmem:[#allocation5 + $0x1f8] sm:$0xff]
    %v182 = vld [vmem:[#allocation5 + $0x200] sm:$0xff]
    %v183 = vld [vmem:[#allocation5 + $0x208] sm:$0xff]
    %v184 = vld [vmem:[#allocation5 + $0x210] sm:$0xff]
    %v185 = vld [vmem:[#allocation5 + $0x218] sm:$0xff]
    %v186 = vld [vmem:[#allocation5 + $0x220] sm:$0xff]
    %v187 = vld [vmem:[#allocation5 + $0x228] sm:$0xff]
    %v188 = vld [vmem:[#allocation5 + $0x230] sm:$0xff]
    %v189 = vld [vmem:[#allocation5 + $0x238] sm:$0xff]
    %v190 = vld [vmem:[#allocation5 + $0x240] sm:$0xff]
    %v191 = vld [vmem:[#allocation5 + $0x248] sm:$0xff]
    %v192 = vld [vmem:[#allocation5 + $0x250] sm:$0xff]
    %v193 = vld [vmem:[#allocation5 + $0x258] sm:$0xff]
    %v194 = vld [vmem:[#allocation5 + $0x260] sm:$0xff]
    %v195 = vld [vmem:[#allocation5 + $0x268] sm:$0xff]
    %v196 = vld [vmem:[#allocation5 + $0x270] sm:$0xff]
    %v197 = vld [vmem:[#allocation5 + $0x278] sm:$0xff]
    %v198 = vld [vmem:[#allocation5 + $0x280] sm:$0xff]
    %v199 = vld [vmem:[#allocation5 + $0x288] sm:$0xff]
    %v200 = vld [vmem:[#allocation5 + $0x290] sm:$0xff]
    %v201 = vld [vmem:[#allocation5 + $0x298] sm:$0xff]
    %v202 = vld [vmem:[#allocation5 + $0x2a0] sm:$0xff]
    %v203 = vld [vmem:[#allocation5 + $0x2a8] sm:$0xff]
    %v204 = vld [vmem:[#allocation5 + $0x2b0] sm:$0xff]
    %v205 = vld [vmem:[#allocation5 + $0x2b8] sm:$0xff]
    %v206 = vld [vmem:[#allocation5 + $0x2c0] sm:$0xff]
    %v207 = vld [vmem:[#allocation5 + $0x2c8] sm:$0xff]
    %v208 = vld [vmem:[#allocation5 + $0x2d0] sm:$0xff]
    %v209 = vld [vmem:[#allocation5 + $0x2d8] sm:$0xff]
    %v210 = vld [vmem:[#allocation5 + $0x2e0] sm:$0xff]
    %v211 = vld [vmem:[#allocation5 + $0x2e8] sm:$0xff]
    %v212 = vld [vmem:[#allocation5 + $0x2f0] sm:$0xff]
    %v213 = vld [vmem:[#allocation5 + $0x2f8] sm:$0xff]
    %v214 = vld [vmem:[#allocation5 + $0x300] sm:$0xff]
    %v215 = vld [vmem:[#allocation5 + $0x308] sm:$0xff]
    %v216 = vld [vmem:[#allocation5 + $0x310] sm:$0xff]
    %v217 = vld [vmem:[#allocation5 + $0x318] sm:$0xff]
    %v218 = vld [vmem:[#allocation5 + $0x320] sm:$0xff]
    %v219 = vld [vmem:[#allocation5 + $0x328] sm:$0xff]
    %v220 = vld [vmem:[#allocation5 + $0x330] sm:$0xff]
    %v221 = vld [vmem:[#allocation5 + $0x338] sm:$0xff]
    %v222 = vld [vmem:[#allocation5 + $0x340] sm:$0xff]
    %v223 = vld [vmem:[#allocation5 + $0x348] sm:$0xff]
    %v224 = vld [vmem:[#allocation5 + $0x350] sm:$0xff]
    %v225 = vld [vmem:[#allocation5 + $0x358] sm:$0xff]
    %v226 = vld [vmem:[#allocation5 + $0x360] sm:$0xff]
    %v227 = vld [vmem:[#allocation5 + $0x368] sm:$0xff]
    %v228 = vld [vmem:[#allocation5 + $0x370] sm:$0xff]
    %v229 = vld [vmem:[#allocation5 + $0x378] sm:$0xff]
    %v230 = vld [vmem:[#allocation5 + $0x380] sm:$0xff]
    %v231 = vld [vmem:[#allocation5 + $0x388] sm:$0xff]
    %v232 = vld [vmem:[#allocation5 + $0x390] sm:$0xff]
    %v233 = vld [vmem:[#allocation5 + $0x398] sm:$0xff]
    %v234 = vld [vmem:[#allocation5 + $0x3a0] sm:$0xff]
    %v235 = vld [vmem:[#allocation5 + $0x3a8] sm:$0xff]
    %v236 = vld [vmem:[#allocation5 + $0x3b0] sm:$0xff]
    %v237 = vld [vmem:[#allocation5 + $0x3b8] sm:$0xff]
    %v238 = vld [vmem:[#allocation5 + $0x3c0] sm:$0xff]
    %v239 = vld [vmem:[#allocation5 + $0x3c8] sm:$0xff]
    %v240 = vld [vmem:[#allocation5 + $0x3d0] sm:$0xff]
    %v241 = vld [vmem:[#allocation5 + $0x3d8] sm:$0xff]
    %v242 = vld [vmem:[#allocation5 + $0x3e0] sm:$0xff]
    %v243 = vld [vmem:[#allocation5 + $0x3e8] sm:$0xff]
    %v244 = vld [vmem:[#allocation5 + $0x3f0] sm:$0xff]
    %v245 = vld [vmem:[#allocation5 + $0x3f8] sm:$0xff]
    %v246 = vld [vmem:[#allocation7] sm:$0xf]
    %v248 = vlaneseq
    %v249 = vshrl.u32 %v248, 7
    %v250 = vsub.s32 0, %v249
    %v251 = vrot.slane %v246, %v250
    %v252 = vlaneseq
    %v253 = vshrl.u32 %v252, 7
    %v254 = vsub.s32 1, %v253
    %v255 = vrot.slane %v246, %v254
    %v256 = vlaneseq
    %v257 = vshrl.u32 %v256, 7
    %v258 = vsub.s32 2, %v257
    %v259 = vrot.slane %v246, %v258
    %v260 = vlaneseq
    %v261 = vshrl.u32 %v260, 7
    %v262 = vsub.s32 3, %v261
    %v263 = vrot.slane %v246, %v262
    %v396 = vunpack.c.l.b16 %v118
    %v397 = vunpack.c.h.b16 %v118
    %v398 = vunpack.c.l.b16 %v119
    %v399 = vunpack.c.h.b16 %v119
    %v400 = vunpack.c.l.b16 %v120
    %v401 = vunpack.c.h.b16 %v120
    %v402 = vunpack.c.l.b16 %v121
    %v403 = vunpack.c.h.b16 %v121
    %v404 = vunpack.c.l.b16 %v122
    %v405 = vunpack.c.h.b16 %v122
    %v406 = vunpack.c.l.b16 %v123
    %v407 = vunpack.c.h.b16 %v123
    %v408 = vunpack.c.l.b16 %v124
    %v409 = vunpack.c.h.b16 %v124
    %v410 = vunpack.c.l.b16 %v125
    %v411 = vunpack.c.h.b16 %v125
    %v412 = vunpack.c.l.b16 %v126
    %v413 = vunpack.c.h.b16 %v126
    %v414 = vunpack.c.l.b16 %v127
    %v415 = vunpack.c.h.b16 %v127
    %v416 = vunpack.c.l.b16 %v128
    %v417 = vunpack.c.h.b16 %v128
    %v418 = vunpack.c.l.b16 %v129
    %v419 = vunpack.c.h.b16 %v129
    %v420 = vunpack.c.l.b16 %v130
    %v421 = vunpack.c.h.b16 %v130
    %v422 = vunpack.c.l.b16 %v131
    %v423 = vunpack.c.h.b16 %v131
    %v424 = vunpack.c.l.b16 %v132
    %v425 = vunpack.c.h.b16 %v132
    %v426 = vunpack.c.l.b16 %v133
    %v427 = vunpack.c.h.b16 %v133
    %v428 = vunpack.c.l.b16 %v134
    %v429 = vunpack.c.h.b16 %v134
    %v430 = vunpack.c.l.b16 %v135
    %v431 = vunpack.c.h.b16 %v135
    %v432 = vunpack.c.l.b16 %v136
    %v433 = vunpack.c.h.b16 %v136
    %v434 = vunpack.c.l.b16 %v137
    %v435 = vunpack.c.h.b16 %v137
    %v436 = vunpack.c.l.b16 %v138
    %v437 = vunpack.c.h.b16 %v138
    %v438 = vunpack.c.l.b16 %v139
    %v439 = vunpack.c.h.b16 %v139
    %v440 = vunpack.c.l.b16 %v140
    %v441 = vunpack.c.h.b16 %v140
    %v442 = vunpack.c.l.b16 %v141
    %v443 = vunpack.c.h.b16 %v141
    %v444 = vunpack.c.l.b16 %v142
    %v445 = vunpack.c.h.b16 %v142
    %v446 = vunpack.c.l.b16 %v143
    %v447 = vunpack.c.h.b16 %v143
    %v448 = vunpack.c.l.b16 %v144
    %v449 = vunpack.c.h.b16 %v144
    %v450 = vunpack.c.l.b16 %v145
    %v451 = vunpack.c.h.b16 %v145
    %v452 = vunpack.c.l.b16 %v146
    %v453 = vunpack.c.h.b16 %v146
    %v454 = vunpack.c.l.b16 %v147
    %v455 = vunpack.c.h.b16 %v147
    %v456 = vunpack.c.l.b16 %v148
    %v457 = vunpack.c.h.b16 %v148
    %v458 = vunpack.c.l.b16 %v149
    %v459 = vunpack.c.h.b16 %v149
    %v460 = vunpack.c.l.b16 %v150
    %v461 = vunpack.c.h.b16 %v150
    %v462 = vunpack.c.l.b16 %v151
    %v463 = vunpack.c.h.b16 %v151
    %v464 = vunpack.c.l.b16 %v152
    %v465 = vunpack.c.h.b16 %v152
    %v466 = vunpack.c.l.b16 %v153
    %v467 = vunpack.c.h.b16 %v153
    %v468 = vunpack.c.l.b16 %v154
    %v469 = vunpack.c.h.b16 %v154
    %v470 = vunpack.c.l.b16 %v155
    %v471 = vunpack.c.h.b16 %v155
    %v472 = vunpack.c.l.b16 %v156
    %v473 = vunpack.c.h.b16 %v156
    %v474 = vunpack.c.l.b16 %v157
    %v475 = vunpack.c.h.b16 %v157
    %v476 = vunpack.c.l.b16 %v158
    %v477 = vunpack.c.h.b16 %v158
    %v478 = vunpack.c.l.b16 %v159
    %v479 = vunpack.c.h.b16 %v159
    %v480 = vunpack.c.l.b16 %v160
    %v481 = vunpack.c.h.b16 %v160
    %v482 = vunpack.c.l.b16 %v161
    %v483 = vunpack.c.h.b16 %v161
    %v484 = vunpack.c.l.b16 %v162
    %v485 = vunpack.c.h.b16 %v162
    %v486 = vunpack.c.l.b16 %v163
    %v487 = vunpack.c.h.b16 %v163
    %v488 = vunpack.c.l.b16 %v164
    %v489 = vunpack.c.h.b16 %v164
    %v490 = vunpack.c.l.b16 %v165
    %v491 = vunpack.c.h.b16 %v165
    %v492 = vunpack.c.l.b16 %v166
    %v493 = vunpack.c.h.b16 %v166
    %v494 = vunpack.c.l.b16 %v167
    %v495 = vunpack.c.h.b16 %v167
    %v496 = vunpack.c.l.b16 %v168
    %v497 = vunpack.c.h.b16 %v168
    %v498 = vunpack.c.l.b16 %v169
    %v499 = vunpack.c.h.b16 %v169
    %v500 = vunpack.c.l.b16 %v170
    %v501 = vunpack.c.h.b16 %v170
    %v502 = vunpack.c.l.b16 %v171
    %v503 = vunpack.c.h.b16 %v171
    %v504 = vunpack.c.l.b16 %v172
    %v505 = vunpack.c.h.b16 %v172
    %v506 = vunpack.c.l.b16 %v173
    %v507 = vunpack.c.h.b16 %v173
    %v508 = vunpack.c.l.b16 %v174
    %v509 = vunpack.c.h.b16 %v174
    %v510 = vunpack.c.l.b16 %v175
    %v511 = vunpack.c.h.b16 %v175
    %v512 = vunpack.c.l.b16 %v176
    %v513 = vunpack.c.h.b16 %v176
    %v514 = vunpack.c.l.b16 %v177
    %v515 = vunpack.c.h.b16 %v177
    %v516 = vunpack.c.l.b16 %v178
    %v517 = vunpack.c.h.b16 %v178
    %v518 = vunpack.c.l.b16 %v179
    %v519 = vunpack.c.h.b16 %v179
    %v520 = vunpack.c.l.b16 %v180
    %v521 = vunpack.c.h.b16 %v180
    %v522 = vunpack.c.l.b16 %v181
    %v523 = vunpack.c.h.b16 %v181
    %v524 = vunpack.c.l.b16 %v182
    %v525 = vunpack.c.h.b16 %v182
    %v526 = vunpack.c.l.b16 %v183
    %v527 = vunpack.c.h.b16 %v183
    %v528 = vunpack.c.l.b16 %v184
    %v529 = vunpack.c.h.b16 %v184
    %v530 = vunpack.c.l.b16 %v185
    %v531 = vunpack.c.h.b16 %v185
    %v532 = vunpack.c.l.b16 %v186
    %v533 = vunpack.c.h.b16 %v186
    %v534 = vunpack.c.l.b16 %v187
    %v535 = vunpack.c.h.b16 %v187
    %v536 = vunpack.c.l.b16 %v188
    %v537 = vunpack.c.h.b16 %v188
    %v538 = vunpack.c.l.b16 %v189
    %v539 = vunpack.c.h.b16 %v189
    %v540 = vunpack.c.l.b16 %v190
    %v541 = vunpack.c.h.b16 %v190
    %v542 = vunpack.c.l.b16 %v191
    %v543 = vunpack.c.h.b16 %v191
    %v544 = vunpack.c.l.b16 %v192
    %v545 = vunpack.c.h.b16 %v192
    %v546 = vunpack.c.l.b16 %v193
    %v547 = vunpack.c.h.b16 %v193
    %v548 = vunpack.c.l.b16 %v194
    %v549 = vunpack.c.h.b16 %v194
    %v550 = vunpack.c.l.b16 %v195
    %v551 = vunpack.c.h.b16 %v195
    %v552 = vunpack.c.l.b16 %v196
    %v553 = vunpack.c.h.b16 %v196
    %v554 = vunpack.c.l.b16 %v197
    %v555 = vunpack.c.h.b16 %v197
    %v556 = vunpack.c.l.b16 %v198
    %v557 = vunpack.c.h.b16 %v198
    %v558 = vunpack.c.l.b16 %v199
    %v559 = vunpack.c.h.b16 %v199
    %v560 = vunpack.c.l.b16 %v200
    %v561 = vunpack.c.h.b16 %v200
    %v562 = vunpack.c.l.b16 %v201
    %v563 = vunpack.c.h.b16 %v201
    %v564 = vunpack.c.l.b16 %v202
    %v565 = vunpack.c.h.b16 %v202
    %v566 = vunpack.c.l.b16 %v203
    %v567 = vunpack.c.h.b16 %v203
    %v568 = vunpack.c.l.b16 %v204
    %v569 = vunpack.c.h.b16 %v204
    %v570 = vunpack.c.l.b16 %v205
    %v571 = vunpack.c.h.b16 %v205
    %v572 = vunpack.c.l.b16 %v206
    %v573 = vunpack.c.h.b16 %v206
    %v574 = vunpack.c.l.b16 %v207
    %v575 = vunpack.c.h.b16 %v207
    %v576 = vunpack.c.l.b16 %v208
    %v577 = vunpack.c.h.b16 %v208
    %v578 = vunpack.c.l.b16 %v209
    %v579 = vunpack.c.h.b16 %v209
    %v580 = vunpack.c.l.b16 %v210
    %v581 = vunpack.c.h.b16 %v210
    %v582 = vunpack.c.l.b16 %v211
    %v583 = vunpack.c.h.b16 %v211
    %v584 = vunpack.c.l.b16 %v212
    %v585 = vunpack.c.h.b16 %v212
    %v586 = vunpack.c.l.b16 %v213
    %v587 = vunpack.c.h.b16 %v213
    %v588 = vunpack.c.l.b16 %v214
    %v589 = vunpack.c.h.b16 %v214
    %v590 = vunpack.c.l.b16 %v215
    %v591 = vunpack.c.h.b16 %v215
    %v592 = vunpack.c.l.b16 %v216
    %v593 = vunpack.c.h.b16 %v216
    %v594 = vunpack.c.l.b16 %v217
    %v595 = vunpack.c.h.b16 %v217
    %v596 = vunpack.c.l.b16 %v218
    %v597 = vunpack.c.h.b16 %v218
    %v598 = vunpack.c.l.b16 %v219
    %v599 = vunpack.c.h.b16 %v219
    %v600 = vunpack.c.l.b16 %v220
    %v601 = vunpack.c.h.b16 %v220
    %v602 = vunpack.c.l.b16 %v221
    %v603 = vunpack.c.h.b16 %v221
    %v604 = vunpack.c.l.b16 %v222
    %v605 = vunpack.c.h.b16 %v222
    %v606 = vunpack.c.l.b16 %v223
    %v607 = vunpack.c.h.b16 %v223
    %v608 = vunpack.c.l.b16 %v224
    %v609 = vunpack.c.h.b16 %v224
    %v610 = vunpack.c.l.b16 %v225
    %v611 = vunpack.c.h.b16 %v225
    %v612 = vunpack.c.l.b16 %v226
    %v613 = vunpack.c.h.b16 %v226
    %v614 = vunpack.c.l.b16 %v227
    %v615 = vunpack.c.h.b16 %v227
    %v616 = vunpack.c.l.b16 %v228
    %v617 = vunpack.c.h.b16 %v228
    %v618 = vunpack.c.l.b16 %v229
    %v619 = vunpack.c.h.b16 %v229
    %v620 = vunpack.c.l.b16 %v230
    %v621 = vunpack.c.h.b16 %v230
    %v622 = vunpack.c.l.b16 %v231
    %v623 = vunpack.c.h.b16 %v231
    %v624 = vunpack.c.l.b16 %v232
    %v625 = vunpack.c.h.b16 %v232
    %v626 = vunpack.c.l.b16 %v233
    %v627 = vunpack.c.h.b16 %v233
    %v628 = vunpack.c.l.b16 %v234
    %v629 = vunpack.c.h.b16 %v234
    %v630 = vunpack.c.l.b16 %v235
    %v631 = vunpack.c.h.b16 %v235
    %v632 = vunpack.c.l.b16 %v236
    %v633 = vunpack.c.h.b16 %v236
    %v634 = vunpack.c.l.b16 %v237
    %v635 = vunpack.c.h.b16 %v237
    %v636 = vunpack.c.l.b16 %v238
    %v637 = vunpack.c.h.b16 %v238
    %v638 = vunpack.c.l.b16 %v239
    %v639 = vunpack.c.h.b16 %v239
    %v640 = vunpack.c.l.b16 %v240
    %v641 = vunpack.c.h.b16 %v240
    %v642 = vunpack.c.l.b16 %v241
    %v643 = vunpack.c.h.b16 %v241
    %v644 = vunpack.c.l.b16 %v242
    %v645 = vunpack.c.h.b16 %v242
    %v646 = vunpack.c.l.b16 %v243
    %v647 = vunpack.c.h.b16 %v243
    %v648 = vunpack.c.l.b16 %v244
    %v649 = vunpack.c.h.b16 %v244
    %v650 = vunpack.c.l.b16 %v245
    %v651 = vunpack.c.h.b16 %v245
    %v652 = vpack.c.b16 %v400, %v396
    %v653 = vpack.c.b16 %v401, %v397
    %v654 = vpack.c.b16 %v402, %v398
    %v655 = vpack.c.b16 %v403, %v399
    %v656 = vpack.c.b16 %v408, %v404
    %v657 = vpack.c.b16 %v409, %v405
    %v658 = vpack.c.b16 %v410, %v406
    %v659 = vpack.c.b16 %v411, %v407
    %v660 = vpack.c.b16 %v416, %v412
    %v661 = vpack.c.b16 %v417, %v413
    %v662 = vpack.c.b16 %v418, %v414
    %v663 = vpack.c.b16 %v419, %v415
    %v664 = vpack.c.b16 %v424, %v420
    %v665 = vpack.c.b16 %v425, %v421
    %v666 = vpack.c.b16 %v426, %v422
    %v667 = vpack.c.b16 %v427, %v423
    %v668 = vpack.c.b16 %v432, %v428
    %v669 = vpack.c.b16 %v433, %v429
    %v670 = vpack.c.b16 %v434, %v430
    %v671 = vpack.c.b16 %v435, %v431
    %v672 = vpack.c.b16 %v440, %v436
    %v673 = vpack.c.b16 %v441, %v437
    %v674 = vpack.c.b16 %v442, %v438
    %v675 = vpack.c.b16 %v443, %v439
    %v676 = vpack.c.b16 %v448, %v444
    %v677 = vpack.c.b16 %v449, %v445
    %v678 = vpack.c.b16 %v450, %v446
    %v679 = vpack.c.b16 %v451, %v447
    %v680 = vpack.c.b16 %v456, %v452
    %v681 = vpack.c.b16 %v457, %v453
    %v682 = vpack.c.b16 %v458, %v454
    %v683 = vpack.c.b16 %v459, %v455
    %v684 = vpack.c.b16 %v464, %v460
    %v685 = vpack.c.b16 %v465, %v461
    %v686 = vpack.c.b16 %v466, %v462
    %v687 = vpack.c.b16 %v467, %v463
    %v688 = vpack.c.b16 %v472, %v468
    %v689 = vpack.c.b16 %v473, %v469
    %v690 = vpack.c.b16 %v474, %v470
    %v691 = vpack.c.b16 %v475, %v471
    %v692 = vpack.c.b16 %v480, %v476
    %v693 = vpack.c.b16 %v481, %v477
    %v694 = vpack.c.b16 %v482, %v478
    %v695 = vpack.c.b16 %v483, %v479
    %v696 = vpack.c.b16 %v488, %v484
    %v697 = vpack.c.b16 %v489, %v485
    %v698 = vpack.c.b16 %v490, %v486
    %v699 = vpack.c.b16 %v491, %v487
    %v700 = vpack.c.b16 %v496, %v492
    %v701 = vpack.c.b16 %v497, %v493
    %v702 = vpack.c.b16 %v498, %v494
    %v703 = vpack.c.b16 %v499, %v495
    %v704 = vpack.c.b16 %v504, %v500
    %v705 = vpack.c.b16 %v505, %v501
    %v706 = vpack.c.b16 %v506, %v502
    %v707 = vpack.c.b16 %v507, %v503
    %v708 = vpack.c.b16 %v512, %v508
    %v709 = vpack.c.b16 %v513, %v509
    %v710 = vpack.c.b16 %v514, %v510
    %v711 = vpack.c.b16 %v515, %v511
    %v712 = vpack.c.b16 %v520, %v516
    %v713 = vpack.c.b16 %v521, %v517
    %v714 = vpack.c.b16 %v522, %v518
    %v715 = vpack.c.b16 %v523, %v519
    %v716 = vpack.c.b16 %v528, %v524
    %v717 = vpack.c.b16 %v529, %v525
    %v718 = vpack.c.b16 %v530, %v526
    %v719 = vpack.c.b16 %v531, %v527
    %v720 = vpack.c.b16 %v536, %v532
    %v721 = vpack.c.b16 %v537, %v533
    %v722 = vpack.c.b16 %v538, %v534
    %v723 = vpack.c.b16 %v539, %v535
    %v724 = vpack.c.b16 %v544, %v540
    %v725 = vpack.c.b16 %v545, %v541
    %v726 = vpack.c.b16 %v546, %v542
    %v727 = vpack.c.b16 %v547, %v543
    %v728 = vpack.c.b16 %v552, %v548
    %v729 = vpack.c.b16 %v553, %v549
    %v730 = vpack.c.b16 %v554, %v550
    %v731 = vpack.c.b16 %v555, %v551
    %v732 = vpack.c.b16 %v560, %v556
    %v733 = vpack.c.b16 %v561, %v557
    %v734 = vpack.c.b16 %v562, %v558
    %v735 = vpack.c.b16 %v563, %v559
    %v736 = vpack.c.b16 %v568, %v564
    %v737 = vpack.c.b16 %v569, %v565
    %v738 = vpack.c.b16 %v570, %v566
    %v739 = vpack.c.b16 %v571, %v567
    %v740 = vpack.c.b16 %v576, %v572
    %v741 = vpack.c.b16 %v577, %v573
    %v742 = vpack.c.b16 %v578, %v574
    %v743 = vpack.c.b16 %v579, %v575
    %v744 = vpack.c.b16 %v584, %v580
    %v745 = vpack.c.b16 %v585, %v581
    %v746 = vpack.c.b16 %v586, %v582
    %v747 = vpack.c.b16 %v587, %v583
    %v748 = vpack.c.b16 %v592, %v588
    %v749 = vpack.c.b16 %v593, %v589
    %v750 = vpack.c.b16 %v594, %v590
    %v751 = vpack.c.b16 %v595, %v591
    %v752 = vpack.c.b16 %v600, %v596
    %v753 = vpack.c.b16 %v601, %v597
    %v754 = vpack.c.b16 %v602, %v598
    %v755 = vpack.c.b16 %v603, %v599
    %v756 = vpack.c.b16 %v608, %v604
    %v757 = vpack.c.b16 %v609, %v605
    %v758 = vpack.c.b16 %v610, %v606
    %v759 = vpack.c.b16 %v611, %v607
    %v760 = vpack.c.b16 %v616, %v612
    %v761 = vpack.c.b16 %v617, %v613
    %v762 = vpack.c.b16 %v618, %v614
    %v763 = vpack.c.b16 %v619, %v615
    %v764 = vpack.c.b16 %v624, %v620
    %v765 = vpack.c.b16 %v625, %v621
    %v766 = vpack.c.b16 %v626, %v622
    %v767 = vpack.c.b16 %v627, %v623
    %v768 = vpack.c.b16 %v632, %v628
    %v769 = vpack.c.b16 %v633, %v629
    %v770 = vpack.c.b16 %v634, %v630
    %v771 = vpack.c.b16 %v635, %v631
    %v772 = vpack.c.b16 %v640, %v636
    %v773 = vpack.c.b16 %v641, %v637
    %v774 = vpack.c.b16 %v642, %v638
    %v775 = vpack.c.b16 %v643, %v639
    %v776 = vpack.c.b16 %v648, %v644
    %v777 = vpack.c.b16 %v649, %v645
    %v778 = vpack.c.b16 %v650, %v646
    %v779 = vpack.c.b16 %v651, %v647
    %908 = vmatprep.subr.bf16.mxu0 %v681
    %909 = vmatpush1.bf16.msra.mxu0 %v680
    %910 = vmatprep.subr.bf16.mxu0 %v677
    %911 = vmatpush1.bf16.msra.mxu0 %v676
    %912 = vmatprep.subr.bf16.mxu0 %v673
    %913 = vmatpush1.bf16.msra.mxu0 %v672
    %914 = vmatprep.subr.bf16.mxu0 %v669
    %915 = vmatpush1.bf16.msra.mxu0 %v668
    %916 = vmatprep.subr.bf16.mxu0 %v665
    %917 = vmatpush1.bf16.msra.mxu0 %v664
    %918 = vmatprep.subr.bf16.mxu0 %v661
    %919 = vmatpush1.bf16.msra.mxu0 %v660
    %920 = vmatprep.subr.bf16.mxu0 %v657
    %921 = vmatpush1.bf16.msra.mxu0 %v656
    %922 = vmatprep.subr.bf16.mxu0 %v653
    %923 = vmatpush1.bf16.msra.mxu0 %v652
    %924 = vmatprep.subr.bf16.mxu0 %v713
    %925 = vmatpush2.bf16.msra.mxu0 %v712
    %926 = vmatprep.subr.bf16.mxu0 %v709
    %927 = vmatpush2.bf16.msra.mxu0 %v708
    %928 = vmatprep.subr.bf16.mxu0 %v705
    %929 = vmatpush2.bf16.msra.mxu0 %v704
    %930 = vmatprep.subr.bf16.mxu0 %v701
    %931 = vmatpush2.bf16.msra.mxu0 %v700
    %932 = vmatprep.subr.bf16.mxu0 %v697
    %933 = vmatpush2.bf16.msra.mxu0 %v696
    %934 = vmatprep.subr.bf16.mxu0 %v693
    %935 = vmatpush2.bf16.msra.mxu0 %v692
    %936 = vmatprep.subr.bf16.mxu0 %v689
    %937 = vmatpush2.bf16.msra.mxu0 %v688
    %938 = vmatprep.subr.bf16.mxu0 %v685
    %939 = vmatpush2.bf16.msra.mxu0 %v684
    %940 = vmatprep.mubr.bf16.mxu0 %v111
    %941 = vmatmul.mubr.bf16.gmra.mxu0 %v110
    %v942 = vpop.f32.mrf.mxu0
    %v943 = vadd.f32 %v251, %v942
    %v944 = vpop.f32.mrf.mxu0
    %v945 = vadd.f32 %v255, %v944
    %v946 = vpop.f32.mrf.mxu0
    %v947 = vadd.f32 %v251, %v946
    %v948 = vpop.f32.mrf.mxu0
    %v949 = vadd.f32 %v255, %v948
    %950 = vmatprep.mubr.bf16.mxu0 %v115
    %951 = vmatmul.mubr.bf16.gmra.mxu0 %v114
    %v952 = vpop.f32.mrf.mxu0
    %v953 = vadd.f32 %v251, %v952
    %v954 = vpop.f32.mrf.mxu0
    %v955 = vadd.f32 %v255, %v954
    %v956 = vpop.f32.mrf.mxu0
    %v957 = vadd.f32 %v251, %v956
    %v958 = vpop.f32.mrf.mxu0
    %v959 = vadd.f32 %v255, %v958
    %960 = vdwg.mxu0
    %961 = vmatprep.subr.bf16.mxu0 %v745
    %962 = vmatpush1.bf16.msra.mxu0 %v744
    %963 = vmatprep.subr.bf16.mxu0 %v741
    %964 = vmatpush1.bf16.msra.mxu0 %v740
    %965 = vmatprep.subr.bf16.mxu0 %v737
    %966 = vmatpush1.bf16.msra.mxu0 %v736
    %967 = vmatprep.subr.bf16.mxu0 %v733
    %968 = vmatpush1.bf16.msra.mxu0 %v732
    %969 = vmatprep.subr.bf16.mxu0 %v729
    %970 = vmatpush1.bf16.msra.mxu0 %v728
    %971 = vmatprep.subr.bf16.mxu0 %v725
    %972 = vmatpush1.bf16.msra.mxu0 %v724
    %973 = vmatprep.subr.bf16.mxu0 %v721
    %974 = vmatpush1.bf16.msra.mxu0 %v720
    %975 = vmatprep.subr.bf16.mxu0 %v717
    %976 = vmatpush1.bf16.msra.mxu0 %v716
    %977 = vmatprep.subr.bf16.mxu0 %v777
    %978 = vmatpush2.bf16.msra.mxu0 %v776
    %979 = vmatprep.subr.bf16.mxu0 %v773
    %980 = vmatpush2.bf16.msra.mxu0 %v772
    %981 = vmatprep.subr.bf16.mxu0 %v769
    %982 = vmatpush2.bf16.msra.mxu0 %v768
    %983 = vmatprep.subr.bf16.mxu0 %v765
    %984 = vmatpush2.bf16.msra.mxu0 %v764
    %985 = vmatprep.subr.bf16.mxu0 %v761
    %986 = vmatpush2.bf16.msra.mxu0 %v760
    %987 = vmatprep.subr.bf16.mxu0 %v757
    %988 = vmatpush2.bf16.msra.mxu0 %v756
    %989 = vmatprep.subr.bf16.mxu0 %v753
    %990 = vmatpush2.bf16.msra.mxu0 %v752
    %991 = vmatprep.subr.bf16.mxu0 %v749
    %992 = vmatpush2.bf16.msra.mxu0 %v748
    %993 = vmatprep.mubr.bf16.mxu0 %v113
    %994 = vmatmul.mubr.bf16.gmra.mxu0 %v112
    %v995 = vpop.f32.mrf.mxu0
    %v996 = vadd.f32 %v943, %v995
    %v997 = vpop.f32.mrf.mxu0
    %v998 = vadd.f32 %v945, %v997
    %v999 = vpop.f32.mrf.mxu0
    %v1000 = vadd.f32 %v947, %v999
    %v1001 = vpop.f32.mrf.mxu0
    %v1002 = vadd.f32 %v949, %v1001
    %1003 = vmatprep.mubr.bf16.mxu0 %v117
    %1004 = vmatmul.mubr.bf16.gmra.mxu0 %v116
    %v1005 = vpop.f32.mrf.mxu0
    %v1006 = vadd.f32 %v953, %v1005
    %v1007 = vpop.f32.mrf.mxu0
    %v1008 = vadd.f32 %v955, %v1007
    %v1009 = vpop.f32.mrf.mxu0
    %v1010 = vadd.f32 %v957, %v1009
    %v1011 = vpop.f32.mrf.mxu0
    %v1012 = vadd.f32 %v959, %v1011
    %1013 = vdwg.mxu0
    %1014 = vmatprep.subr.bf16.mxu0 %v683
    %1015 = vmatpush1.bf16.msra.mxu0 %v682
    %1016 = vmatprep.subr.bf16.mxu0 %v679
    %1017 = vmatpush1.bf16.msra.mxu0 %v678
    %1018 = vmatprep.subr.bf16.mxu0 %v675
    %1019 = vmatpush1.bf16.msra.mxu0 %v674
    %1020 = vmatprep.subr.bf16.mxu0 %v671
    %1021 = vmatpush1.bf16.msra.mxu0 %v670
    %1022 = vmatprep.subr.bf16.mxu0 %v667
    %1023 = vmatpush1.bf16.msra.mxu0 %v666
    %1024 = vmatprep.subr.bf16.mxu0 %v663
    %1025 = vmatpush1.bf16.msra.mxu0 %v662
    %1026 = vmatprep.subr.bf16.mxu0 %v659
    %1027 = vmatpush1.bf16.msra.mxu0 %v658
    %1028 = vmatprep.subr.bf16.mxu0 %v655
    %1029 = vmatpush1.bf16.msra.mxu0 %v654
    %1030 = vmatprep.subr.bf16.mxu0 %v715
    %1031 = vmatpush2.bf16.msra.mxu0 %v714
    %1032 = vmatprep.subr.bf16.mxu0 %v711
    %1033 = vmatpush2.bf16.msra.mxu0 %v710
    %1034 = vmatprep.subr.bf16.mxu0 %v707
    %1035 = vmatpush2.bf16.msra.mxu0 %v706
    %1036 = vmatprep.subr.bf16.mxu0 %v703
    %1037 = vmatpush2.bf16.msra.mxu0 %v702
    %1038 = vmatprep.subr.bf16.mxu0 %v699
    %1039 = vmatpush2.bf16.msra.mxu0 %v698
    %1040 = vmatprep.subr.bf16.mxu0 %v695
    %1041 = vmatpush2.bf16.msra.mxu0 %v694
    %1042 = vmatprep.subr.bf16.mxu0 %v691
    %1043 = vmatpush2.bf16.msra.mxu0 %v690
    %1044 = vmatprep.subr.bf16.mxu0 %v687
    %1045 = vmatpush2.bf16.msra.mxu0 %v686
    %1046 = vmatprep.mubr.bf16.mxu0 %v111
    %1047 = vmatmul.mubr.bf16.gmra.mxu0 %v110
    %v1048 = vpop.f32.mrf.mxu0
    %v1049 = vadd.f32 %v259, %v1048
    %v1050 = vpop.f32.mrf.mxu0
    %v1051 = vadd.f32 %v263, %v1050
    %v1052 = vpop.f32.mrf.mxu0
    %v1053 = vadd.f32 %v259, %v1052
    %v1054 = vpop.f32.mrf.mxu0
    %v1055 = vadd.f32 %v263, %v1054
    %1056 = vmatprep.mubr.bf16.mxu0 %v115
    %1057 = vmatmul.mubr.bf16.gmra.mxu0 %v114
    %v1058 = vpop.f32.mrf.mxu0
    %v1059 = vadd.f32 %v259, %v1058
    %v1060 = vpop.f32.mrf.mxu0
    %v1061 = vadd.f32 %v263, %v1060
    %v1062 = vpop.f32.mrf.mxu0
    %v1063 = vadd.f32 %v259, %v1062
    %v1064 = vpop.f32.mrf.mxu0
    %v1065 = vadd.f32 %v263, %v1064
    %1066 = vdwg.mxu0
    %1067 = vmatprep.subr.bf16.mxu0 %v747
    %1068 = vmatpush1.bf16.msra.mxu0 %v746
    %1069 = vmatprep.subr.bf16.mxu0 %v743
    %1070 = vmatpush1.bf16.msra.mxu0 %v742
    %1071 = vmatprep.subr.bf16.mxu0 %v739
    %1072 = vmatpush1.bf16.msra.mxu0 %v738
    %1073 = vmatprep.subr.bf16.mxu0 %v735
    %1074 = vmatpush1.bf16.msra.mxu0 %v734
    %1075 = vmatprep.subr.bf16.mxu0 %v731
    %1076 = vmatpush1.bf16.msra.mxu0 %v730
    %1077 = vmatprep.subr.bf16.mxu0 %v727
    %1078 = vmatpush1.bf16.msra.mxu0 %v726
    %1079 = vmatprep.subr.bf16.mxu0 %v723
    %1080 = vmatpush1.bf16.msra.mxu0 %v722
    %1081 = vmatprep.subr.bf16.mxu0 %v719
    %1082 = vmatpush1.bf16.msra.mxu0 %v718
    %1083 = vmatprep.subr.bf16.mxu0 %v779
    %1084 = vmatpush2.bf16.msra.mxu0 %v778
    %1085 = vmatprep.subr.bf16.mxu0 %v775
    %1086 = vmatpush2.bf16.msra.mxu0 %v774
    %1087 = vmatprep.subr.bf16.mxu0 %v771
    %1088 = vmatpush2.bf16.msra.mxu0 %v770
    %1089 = vmatprep.subr.bf16.mxu0 %v767
    %1090 = vmatpush2.bf16.msra.mxu0 %v766
    %1091 = vmatprep.subr.bf16.mxu0 %v763
    %1092 = vmatpush2.bf16.msra.mxu0 %v762
    %1093 = vmatprep.subr.bf16.mxu0 %v759
    %1094 = vmatpush2.bf16.msra.mxu0 %v758
    %1095 = vmatprep.subr.bf16.mxu0 %v755
    %1096 = vmatpush2.bf16.msra.mxu0 %v754
    %1097 = vmatprep.subr.bf16.mxu0 %v751
    %1098 = vmatpush2.bf16.msra.mxu0 %v750
    %1099 = vmatprep.mubr.bf16.mxu0 %v113
    %1100 = vmatmul.mubr.bf16.gmra.mxu0 %v112
    %v1101 = vpop.f32.mrf.mxu0
    %v1102 = vadd.f32 %v1049, %v1101
    %v1103 = vpop.f32.mrf.mxu0
    %v1104 = vadd.f32 %v1051, %v1103
    %v1105 = vpop.f32.mrf.mxu0
    %v1106 = vadd.f32 %v1053, %v1105
    %v1107 = vpop.f32.mrf.mxu0
    %v1108 = vadd.f32 %v1055, %v1107
    %1109 = vmatprep.mubr.bf16.mxu0 %v117
    %1110 = vmatmul.mubr.bf16.gmra.mxu0 %v116
    %v1111 = vpop.f32.mrf.mxu0
    %v1112 = vadd.f32 %v1059, %v1111
    %v1113 = vpop.f32.mrf.mxu0
    %v1114 = vadd.f32 %v1061, %v1113
    %v1115 = vpop.f32.mrf.mxu0
    %v1116 = vadd.f32 %v1063, %v1115
    %v1117 = vpop.f32.mrf.mxu0
    %v1118 = vadd.f32 %v1065, %v1117
    %1119 = vdwg.mxu0
    %v1120 = vpack.c.bf16 %v1000, %v996
    %v1121 = vpack.c.bf16 %v1002, %v998
    %v1122 = vpack.c.bf16 %v1106, %v1102
    %v1123 = vpack.c.bf16 %v1108, %v1104
    %v1124 = vpack.c.bf16 %v1010, %v1006
    %v1125 = vpack.c.bf16 %v1012, %v1008
    %v1126 = vpack.c.bf16 %v1116, %v1112
    %v1127 = vpack.c.bf16 %v1118, %v1114
    %v1128 = vmax.bf16 %v1120, 0
    %v1129 = vmax.bf16 %v1121, 0
    %v1130 = vmax.bf16 %v1122, 0
    %v1131 = vmax.bf16 %v1123, 0
    %v1132 = vmax.bf16 %v1124, 0
    %v1133 = vmax.bf16 %v1125, 0
    %v1134 = vmax.bf16 %v1126, 0
    %v1135 = vmax.bf16 %v1127, 0
    %v1136 = vld [vmem:[#allocation8] sm:$0xff]
    %v1137 = vld [vmem:[#allocation8 + $0x8] sm:$0xff]
    %v1138 = vld [vmem:[#allocation8 + $0x10] sm:$0xff]
    %v1139 = vld [vmem:[#allocation8 + $0x18] sm:$0xff]
    %v1140 = vld [vmem:[#allocation8 + $0x20] sm:$0xff]
    %v1141 = vld [vmem:[#allocation8 + $0x28] sm:$0xff]
    %v1142 = vld [vmem:[#allocation8 + $0x30] sm:$0xff]
    %v1143 = vld [vmem:[#allocation8 + $0x38] sm:$0xff]
    %v1144 = vld [vmem:[#allocation8 + $0x40] sm:$0xff]
    %v1145 = vld [vmem:[#allocation8 + $0x48] sm:$0xff]
    %v1146 = vld [vmem:[#allocation8 + $0x50] sm:$0xff]
    %v1147 = vld [vmem:[#allocation8 + $0x58] sm:$0xff]
    %v1148 = vld [vmem:[#allocation8 + $0x60] sm:$0xff]
    %v1149 = vld [vmem:[#allocation8 + $0x68] sm:$0xff]
    %v1150 = vld [vmem:[#allocation8 + $0x70] sm:$0xff]
    %v1151 = vld [vmem:[#allocation8 + $0x78] sm:$0xff]
    %v1152 = vld [vmem:[#allocation8 + $0x80] sm:$0xff]
    %v1153 = vld [vmem:[#allocation8 + $0x88] sm:$0xff]
    %v1154 = vld [vmem:[#allocation8 + $0x90] sm:$0xff]
    %v1155 = vld [vmem:[#allocation8 + $0x98] sm:$0xff]
    %v1156 = vld [vmem:[#allocation8 + $0xa0] sm:$0xff]
    %v1157 = vld [vmem:[#allocation8 + $0xa8] sm:$0xff]
    %v1158 = vld [vmem:[#allocation8 + $0xb0] sm:$0xff]
    %v1159 = vld [vmem:[#allocation8 + $0xb8] sm:$0xff]
    %v1160 = vld [vmem:[#allocation8 + $0xc0] sm:$0xff]
    %v1161 = vld [vmem:[#allocation8 + $0xc8] sm:$0xff]
    %v1162 = vld [vmem:[#allocation8 + $0xd0] sm:$0xff]
    %v1163 = vld [vmem:[#allocation8 + $0xd8] sm:$0xff]
    %v1164 = vld [vmem:[#allocation8 + $0xe0] sm:$0xff]
    %v1165 = vld [vmem:[#allocation8 + $0xe8] sm:$0xff]
    %v1166 = vld [vmem:[#allocation8 + $0xf0] sm:$0xff]
    %v1167 = vld [vmem:[#allocation8 + $0xf8] sm:$0xff]
    %v1168 = vld [vmem:[#allocation8 + $0x100] sm:$0xff]
    %v1169 = vld [vmem:[#allocation8 + $0x108] sm:$0xff]
    %v1170 = vld [vmem:[#allocation8 + $0x110] sm:$0xff]
    %v1171 = vld [vmem:[#allocation8 + $0x118] sm:$0xff]
    %v1172 = vld [vmem:[#allocation8 + $0x120] sm:$0xff]
    %v1173 = vld [vmem:[#allocation8 + $0x128] sm:$0xff]
    %v1174 = vld [vmem:[#allocation8 + $0x130] sm:$0xff]
    %v1175 = vld [vmem:[#allocation8 + $0x138] sm:$0xff]
    %v1176 = vld [vmem:[#allocation8 + $0x140] sm:$0xff]
    %v1177 = vld [vmem:[#allocation8 + $0x148] sm:$0xff]
    %v1178 = vld [vmem:[#allocation8 + $0x150] sm:$0xff]
    %v1179 = vld [vmem:[#allocation8 + $0x158] sm:$0xff]
    %v1180 = vld [vmem:[#allocation8 + $0x160] sm:$0xff]
    %v1181 = vld [vmem:[#allocation8 + $0x168] sm:$0xff]
    %v1182 = vld [vmem:[#allocation8 + $0x170] sm:$0xff]
    %v1183 = vld [vmem:[#allocation8 + $0x178] sm:$0xff]
    %v1184 = vld [vmem:[#allocation8 + $0x180] sm:$0xff]
    %v1185 = vld [vmem:[#allocation8 + $0x188] sm:$0xff]
    %v1186 = vld [vmem:[#allocation8 + $0x190] sm:$0xff]
    %v1187 = vld [vmem:[#allocation8 + $0x198] sm:$0xff]
    %v1188 = vld [vmem:[#allocation8 + $0x1a0] sm:$0xff]
    %v1189 = vld [vmem:[#allocation8 + $0x1a8] sm:$0xff]
    %v1190 = vld [vmem:[#allocation8 + $0x1b0] sm:$0xff]
    %v1191 = vld [vmem:[#allocation8 + $0x1b8] sm:$0xff]
    %v1192 = vld [vmem:[#allocation8 + $0x1c0] sm:$0xff]
    %v1193 = vld [vmem:[#allocation8 + $0x1c8] sm:$0xff]
    %v1194 = vld [vmem:[#allocation8 + $0x1d0] sm:$0xff]
    %v1195 = vld [vmem:[#allocation8 + $0x1d8] sm:$0xff]
    %v1196 = vld [vmem:[#allocation8 + $0x1e0] sm:$0xff]
    %v1197 = vld [vmem:[#allocation8 + $0x1e8] sm:$0xff]
    %v1198 = vld [vmem:[#allocation8 + $0x1f0] sm:$0xff]
    %v1199 = vld [vmem:[#allocation8 + $0x1f8] sm:$0xff]
    %v1200 = vld [vmem:[#allocation8 + $0x200] sm:$0xff]
    %v1201 = vld [vmem:[#allocation8 + $0x208] sm:$0xff]
    %v1202 = vld [vmem:[#allocation8 + $0x210] sm:$0xff]
    %v1203 = vld [vmem:[#allocation8 + $0x218] sm:$0xff]
    %v1204 = vld [vmem:[#allocation8 + $0x220] sm:$0xff]
    %v1205 = vld [vmem:[#allocation8 + $0x228] sm:$0xff]
    %v1206 = vld [vmem:[#allocation8 + $0x230] sm:$0xff]
    %v1207 = vld [vmem:[#allocation8 + $0x238] sm:$0xff]
    %v1208 = vld [vmem:[#allocation8 + $0x240] sm:$0xff]
    %v1209 = vld [vmem:[#allocation8 + $0x248] sm:$0xff]
    %v1210 = vld [vmem:[#allocation8 + $0x250] sm:$0xff]
    %v1211 = vld [vmem:[#allocation8 + $0x258] sm:$0xff]
    %v1212 = vld [vmem:[#allocation8 + $0x260] sm:$0xff]
    %v1213 = vld [vmem:[#allocation8 + $0x268] sm:$0xff]
    %v1214 = vld [vmem:[#allocation8 + $0x270] sm:$0xff]
    %v1215 = vld [vmem:[#allocation8 + $0x278] sm:$0xff]
    %v1216 = vld [vmem:[#allocation8 + $0x280] sm:$0xff]
    %v1217 = vld [vmem:[#allocation8 + $0x288] sm:$0xff]
    %v1218 = vld [vmem:[#allocation8 + $0x290] sm:$0xff]
    %v1219 = vld [vmem:[#allocation8 + $0x298] sm:$0xff]
    %v1220 = vld [vmem:[#allocation8 + $0x2a0] sm:$0xff]
    %v1221 = vld [vmem:[#allocation8 + $0x2a8] sm:$0xff]
    %v1222 = vld [vmem:[#allocation8 + $0x2b0] sm:$0xff]
    %v1223 = vld [vmem:[#allocation8 + $0x2b8] sm:$0xff]
    %v1224 = vld [vmem:[#allocation8 + $0x2c0] sm:$0xff]
    %v1225 = vld [vmem:[#allocation8 + $0x2c8] sm:$0xff]
    %v1226 = vld [vmem:[#allocation8 + $0x2d0] sm:$0xff]
    %v1227 = vld [vmem:[#allocation8 + $0x2d8] sm:$0xff]
    %v1228 = vld [vmem:[#allocation8 + $0x2e0] sm:$0xff]
    %v1229 = vld [vmem:[#allocation8 + $0x2e8] sm:$0xff]
    %v1230 = vld [vmem:[#allocation8 + $0x2f0] sm:$0xff]
    %v1231 = vld [vmem:[#allocation8 + $0x2f8] sm:$0xff]
    %v1232 = vld [vmem:[#allocation8 + $0x300] sm:$0xff]
    %v1233 = vld [vmem:[#allocation8 + $0x308] sm:$0xff]
    %v1234 = vld [vmem:[#allocation8 + $0x310] sm:$0xff]
    %v1235 = vld [vmem:[#allocation8 + $0x318] sm:$0xff]
    %v1236 = vld [vmem:[#allocation8 + $0x320] sm:$0xff]
    %v1237 = vld [vmem:[#allocation8 + $0x328] sm:$0xff]
    %v1238 = vld [vmem:[#allocation8 + $0x330] sm:$0xff]
    %v1239 = vld [vmem:[#allocation8 + $0x338] sm:$0xff]
    %v1240 = vld [vmem:[#allocation8 + $0x340] sm:$0xff]
    %v1241 = vld [vmem:[#allocation8 + $0x348] sm:$0xff]
    %v1242 = vld [vmem:[#allocation8 + $0x350] sm:$0xff]
    %v1243 = vld [vmem:[#allocation8 + $0x358] sm:$0xff]
    %v1244 = vld [vmem:[#allocation8 + $0x360] sm:$0xff]
    %v1245 = vld [vmem:[#allocation8 + $0x368] sm:$0xff]
    %v1246 = vld [vmem:[#allocation8 + $0x370] sm:$0xff]
    %v1247 = vld [vmem:[#allocation8 + $0x378] sm:$0xff]
    %v1248 = vld [vmem:[#allocation8 + $0x380] sm:$0xff]
    %v1249 = vld [vmem:[#allocation8 + $0x388] sm:$0xff]
    %v1250 = vld [vmem:[#allocation8 + $0x390] sm:$0xff]
    %v1251 = vld [vmem:[#allocation8 + $0x398] sm:$0xff]
    %v1252 = vld [vmem:[#allocation8 + $0x3a0] sm:$0xff]
    %v1253 = vld [vmem:[#allocation8 + $0x3a8] sm:$0xff]
    %v1254 = vld [vmem:[#allocation8 + $0x3b0] sm:$0xff]
    %v1255 = vld [vmem:[#allocation8 + $0x3b8] sm:$0xff]
    %v1256 = vld [vmem:[#allocation8 + $0x3c0] sm:$0xff]
    %v1257 = vld [vmem:[#allocation8 + $0x3c8] sm:$0xff]
    %v1258 = vld [vmem:[#allocation8 + $0x3d0] sm:$0xff]
    %v1259 = vld [vmem:[#allocation8 + $0x3d8] sm:$0xff]
    %v1260 = vld [vmem:[#allocation8 + $0x3e0] sm:$0xff]
    %v1261 = vld [vmem:[#allocation8 + $0x3e8] sm:$0xff]
    %v1262 = vld [vmem:[#allocation8 + $0x3f0] sm:$0xff]
    %v1263 = vld [vmem:[#allocation8 + $0x3f8] sm:$0xff]
    %v1264 = vld [vmem:[%s4] sm:$0xf]
    %v1266 = vlaneseq
    %v1267 = vshrl.u32 %v1266, 7
    %v1268 = vsub.s32 0, %v1267
    %v1269 = vrot.slane %v1264, %v1268
    %v1270 = vlaneseq
    %v1271 = vshrl.u32 %v1270, 7
    %v1272 = vsub.s32 1, %v1271
    %v1273 = vrot.slane %v1264, %v1272
    %v1274 = vlaneseq
    %v1275 = vshrl.u32 %v1274, 7
    %v1276 = vsub.s32 2, %v1275
    %v1277 = vrot.slane %v1264, %v1276
    %v1278 = vlaneseq
    %v1279 = vshrl.u32 %v1278, 7
    %v1280 = vsub.s32 3, %v1279
    %v1281 = vrot.slane %v1264, %v1280
    %v1414 = vunpack.c.l.b16 %v1136
    %v1415 = vunpack.c.h.b16 %v1136
    %v1416 = vunpack.c.l.b16 %v1137
    %v1417 = vunpack.c.h.b16 %v1137
    %v1418 = vunpack.c.l.b16 %v1138
    %v1419 = vunpack.c.h.b16 %v1138
    %v1420 = vunpack.c.l.b16 %v1139
    %v1421 = vunpack.c.h.b16 %v1139
    %v1422 = vunpack.c.l.b16 %v1140
    %v1423 = vunpack.c.h.b16 %v1140
    %v1424 = vunpack.c.l.b16 %v1141
    %v1425 = vunpack.c.h.b16 %v1141
    %v1426 = vunpack.c.l.b16 %v1142
    %v1427 = vunpack.c.h.b16 %v1142
    %v1428 = vunpack.c.l.b16 %v1143
    %v1429 = vunpack.c.h.b16 %v1143
    %v1430 = vunpack.c.l.b16 %v1144
    %v1431 = vunpack.c.h.b16 %v1144
    %v1432 = vunpack.c.l.b16 %v1145
    %v1433 = vunpack.c.h.b16 %v1145
    %v1434 = vunpack.c.l.b16 %v1146
    %v1435 = vunpack.c.h.b16 %v1146
    %v1436 = vunpack.c.l.b16 %v1147
    %v1437 = vunpack.c.h.b16 %v1147
    %v1438 = vunpack.c.l.b16 %v1148
    %v1439 = vunpack.c.h.b16 %v1148
    %v1440 = vunpack.c.l.b16 %v1149
    %v1441 = vunpack.c.h.b16 %v1149
    %v1442 = vunpack.c.l.b16 %v1150
    %v1443 = vunpack.c.h.b16 %v1150
    %v1444 = vunpack.c.l.b16 %v1151
    %v1445 = vunpack.c.h.b16 %v1151
    %v1446 = vunpack.c.l.b16 %v1152
    %v1447 = vunpack.c.h.b16 %v1152
    %v1448 = vunpack.c.l.b16 %v1153
    %v1449 = vunpack.c.h.b16 %v1153
    %v1450 = vunpack.c.l.b16 %v1154
    %v1451 = vunpack.c.h.b16 %v1154
    %v1452 = vunpack.c.l.b16 %v1155
    %v1453 = vunpack.c.h.b16 %v1155
    %v1454 = vunpack.c.l.b16 %v1156
    %v1455 = vunpack.c.h.b16 %v1156
    %v1456 = vunpack.c.l.b16 %v1157
    %v1457 = vunpack.c.h.b16 %v1157
    %v1458 = vunpack.c.l.b16 %v1158
    %v1459 = vunpack.c.h.b16 %v1158
    %v1460 = vunpack.c.l.b16 %v1159
    %v1461 = vunpack.c.h.b16 %v1159
    %v1462 = vunpack.c.l.b16 %v1160
    %v1463 = vunpack.c.h.b16 %v1160
    %v1464 = vunpack.c.l.b16 %v1161
    %v1465 = vunpack.c.h.b16 %v1161
    %v1466 = vunpack.c.l.b16 %v1162
    %v1467 = vunpack.c.h.b16 %v1162
    %v1468 = vunpack.c.l.b16 %v1163
    %v1469 = vunpack.c.h.b16 %v1163
    %v1470 = vunpack.c.l.b16 %v1164
    %v1471 = vunpack.c.h.b16 %v1164
    %v1472 = vunpack.c.l.b16 %v1165
    %v1473 = vunpack.c.h.b16 %v1165
    %v1474 = vunpack.c.l.b16 %v1166
    %v1475 = vunpack.c.h.b16 %v1166
    %v1476 = vunpack.c.l.b16 %v1167
    %v1477 = vunpack.c.h.b16 %v1167
    %v1478 = vunpack.c.l.b16 %v1168
    %v1479 = vunpack.c.h.b16 %v1168
    %v1480 = vunpack.c.l.b16 %v1169
    %v1481 = vunpack.c.h.b16 %v1169
    %v1482 = vunpack.c.l.b16 %v1170
    %v1483 = vunpack.c.h.b16 %v1170
    %v1484 = vunpack.c.l.b16 %v1171
    %v1485 = vunpack.c.h.b16 %v1171
    %v1486 = vunpack.c.l.b16 %v1172
    %v1487 = vunpack.c.h.b16 %v1172
    %v1488 = vunpack.c.l.b16 %v1173
    %v1489 = vunpack.c.h.b16 %v1173
    %v1490 = vunpack.c.l.b16 %v1174
    %v1491 = vunpack.c.h.b16 %v1174
    %v1492 = vunpack.c.l.b16 %v1175
    %v1493 = vunpack.c.h.b16 %v1175
    %v1494 = vunpack.c.l.b16 %v1176
    %v1495 = vunpack.c.h.b16 %v1176
    %v1496 = vunpack.c.l.b16 %v1177
    %v1497 = vunpack.c.h.b16 %v1177
    %v1498 = vunpack.c.l.b16 %v1178
    %v1499 = vunpack.c.h.b16 %v1178
    %v1500 = vunpack.c.l.b16 %v1179
    %v1501 = vunpack.c.h.b16 %v1179
    %v1502 = vunpack.c.l.b16 %v1180
    %v1503 = vunpack.c.h.b16 %v1180
    %v1504 = vunpack.c.l.b16 %v1181
    %v1505 = vunpack.c.h.b16 %v1181
    %v1506 = vunpack.c.l.b16 %v1182
    %v1507 = vunpack.c.h.b16 %v1182
    %v1508 = vunpack.c.l.b16 %v1183
    %v1509 = vunpack.c.h.b16 %v1183
    %v1510 = vunpack.c.l.b16 %v1184
    %v1511 = vunpack.c.h.b16 %v1184
    %v1512 = vunpack.c.l.b16 %v1185
    %v1513 = vunpack.c.h.b16 %v1185
    %v1514 = vunpack.c.l.b16 %v1186
    %v1515 = vunpack.c.h.b16 %v1186
    %v1516 = vunpack.c.l.b16 %v1187
    %v1517 = vunpack.c.h.b16 %v1187
    %v1518 = vunpack.c.l.b16 %v1188
    %v1519 = vunpack.c.h.b16 %v1188
    %v1520 = vunpack.c.l.b16 %v1189
    %v1521 = vunpack.c.h.b16 %v1189
    %v1522 = vunpack.c.l.b16 %v1190
    %v1523 = vunpack.c.h.b16 %v1190
    %v1524 = vunpack.c.l.b16 %v1191
    %v1525 = vunpack.c.h.b16 %v1191
    %v1526 = vunpack.c.l.b16 %v1192
    %v1527 = vunpack.c.h.b16 %v1192
    %v1528 = vunpack.c.l.b16 %v1193
    %v1529 = vunpack.c.h.b16 %v1193
    %v1530 = vunpack.c.l.b16 %v1194
    %v1531 = vunpack.c.h.b16 %v1194
    %v1532 = vunpack.c.l.b16 %v1195
    %v1533 = vunpack.c.h.b16 %v1195
    %v1534 = vunpack.c.l.b16 %v1196
    %v1535 = vunpack.c.h.b16 %v1196
    %v1536 = vunpack.c.l.b16 %v1197
    %v1537 = vunpack.c.h.b16 %v1197
    %v1538 = vunpack.c.l.b16 %v1198
    %v1539 = vunpack.c.h.b16 %v1198
    %v1540 = vunpack.c.l.b16 %v1199
    %v1541 = vunpack.c.h.b16 %v1199
    %v1542 = vunpack.c.l.b16 %v1200
    %v1543 = vunpack.c.h.b16 %v1200
    %v1544 = vunpack.c.l.b16 %v1201
    %v1545 = vunpack.c.h.b16 %v1201
    %v1546 = vunpack.c.l.b16 %v1202
    %v1547 = vunpack.c.h.b16 %v1202
    %v1548 = vunpack.c.l.b16 %v1203
    %v1549 = vunpack.c.h.b16 %v1203
    %v1550 = vunpack.c.l.b16 %v1204
    %v1551 = vunpack.c.h.b16 %v1204
    %v1552 = vunpack.c.l.b16 %v1205
    %v1553 = vunpack.c.h.b16 %v1205
    %v1554 = vunpack.c.l.b16 %v1206
    %v1555 = vunpack.c.h.b16 %v1206
    %v1556 = vunpack.c.l.b16 %v1207
    %v1557 = vunpack.c.h.b16 %v1207
    %v1558 = vunpack.c.l.b16 %v1208
    %v1559 = vunpack.c.h.b16 %v1208
    %v1560 = vunpack.c.l.b16 %v1209
    %v1561 = vunpack.c.h.b16 %v1209
    %v1562 = vunpack.c.l.b16 %v1210
    %v1563 = vunpack.c.h.b16 %v1210
    %v1564 = vunpack.c.l.b16 %v1211
    %v1565 = vunpack.c.h.b16 %v1211
    %v1566 = vunpack.c.l.b16 %v1212
    %v1567 = vunpack.c.h.b16 %v1212
    %v1568 = vunpack.c.l.b16 %v1213
    %v1569 = vunpack.c.h.b16 %v1213
    %v1570 = vunpack.c.l.b16 %v1214
    %v1571 = vunpack.c.h.b16 %v1214
    %v1572 = vunpack.c.l.b16 %v1215
    %v1573 = vunpack.c.h.b16 %v1215
    %v1574 = vunpack.c.l.b16 %v1216
    %v1575 = vunpack.c.h.b16 %v1216
    %v1576 = vunpack.c.l.b16 %v1217
    %v1577 = vunpack.c.h.b16 %v1217
    %v1578 = vunpack.c.l.b16 %v1218
    %v1579 = vunpack.c.h.b16 %v1218
    %v1580 = vunpack.c.l.b16 %v1219
    %v1581 = vunpack.c.h.b16 %v1219
    %v1582 = vunpack.c.l.b16 %v1220
    %v1583 = vunpack.c.h.b16 %v1220
    %v1584 = vunpack.c.l.b16 %v1221
    %v1585 = vunpack.c.h.b16 %v1221
    %v1586 = vunpack.c.l.b16 %v1222
    %v1587 = vunpack.c.h.b16 %v1222
    %v1588 = vunpack.c.l.b16 %v1223
    %v1589 = vunpack.c.h.b16 %v1223
    %v1590 = vunpack.c.l.b16 %v1224
    %v1591 = vunpack.c.h.b16 %v1224
    %v1592 = vunpack.c.l.b16 %v1225
    %v1593 = vunpack.c.h.b16 %v1225
    %v1594 = vunpack.c.l.b16 %v1226
    %v1595 = vunpack.c.h.b16 %v1226
    %v1596 = vunpack.c.l.b16 %v1227
    %v1597 = vunpack.c.h.b16 %v1227
    %v1598 = vunpack.c.l.b16 %v1228
    %v1599 = vunpack.c.h.b16 %v1228
    %v1600 = vunpack.c.l.b16 %v1229
    %v1601 = vunpack.c.h.b16 %v1229
    %v1602 = vunpack.c.l.b16 %v1230
    %v1603 = vunpack.c.h.b16 %v1230
    %v1604 = vunpack.c.l.b16 %v1231
    %v1605 = vunpack.c.h.b16 %v1231
    %v1606 = vunpack.c.l.b16 %v1232
    %v1607 = vunpack.c.h.b16 %v1232
    %v1608 = vunpack.c.l.b16 %v1233
    %v1609 = vunpack.c.h.b16 %v1233
    %v1610 = vunpack.c.l.b16 %v1234
    %v1611 = vunpack.c.h.b16 %v1234
    %v1612 = vunpack.c.l.b16 %v1235
    %v1613 = vunpack.c.h.b16 %v1235
    %v1614 = vunpack.c.l.b16 %v1236
    %v1615 = vunpack.c.h.b16 %v1236
    %v1616 = vunpack.c.l.b16 %v1237
    %v1617 = vunpack.c.h.b16 %v1237
    %v1618 = vunpack.c.l.b16 %v1238
    %v1619 = vunpack.c.h.b16 %v1238
    %v1620 = vunpack.c.l.b16 %v1239
    %v1621 = vunpack.c.h.b16 %v1239
    %v1622 = vunpack.c.l.b16 %v1240
    %v1623 = vunpack.c.h.b16 %v1240
    %v1624 = vunpack.c.l.b16 %v1241
    %v1625 = vunpack.c.h.b16 %v1241
    %v1626 = vunpack.c.l.b16 %v1242
    %v1627 = vunpack.c.h.b16 %v1242
    %v1628 = vunpack.c.l.b16 %v1243
    %v1629 = vunpack.c.h.b16 %v1243
    %v1630 = vunpack.c.l.b16 %v1244
    %v1631 = vunpack.c.h.b16 %v1244
    %v1632 = vunpack.c.l.b16 %v1245
    %v1633 = vunpack.c.h.b16 %v1245
    %v1634 = vunpack.c.l.b16 %v1246
    %v1635 = vunpack.c.h.b16 %v1246
    %v1636 = vunpack.c.l.b16 %v1247
    %v1637 = vunpack.c.h.b16 %v1247
    %v1638 = vunpack.c.l.b16 %v1248
    %v1639 = vunpack.c.h.b16 %v1248
    %v1640 = vunpack.c.l.b16 %v1249
    %v1641 = vunpack.c.h.b16 %v1249
    %v1642 = vunpack.c.l.b16 %v1250
    %v1643 = vunpack.c.h.b16 %v1250
    %v1644 = vunpack.c.l.b16 %v1251
    %v1645 = vunpack.c.h.b16 %v1251
    %v1646 = vunpack.c.l.b16 %v1252
    %v1647 = vunpack.c.h.b16 %v1252
    %v1648 = vunpack.c.l.b16 %v1253
    %v1649 = vunpack.c.h.b16 %v1253
    %v1650 = vunpack.c.l.b16 %v1254
    %v1651 = vunpack.c.h.b16 %v1254
    %v1652 = vunpack.c.l.b16 %v1255
    %v1653 = vunpack.c.h.b16 %v1255
    %v1654 = vunpack.c.l.b16 %v1256
    %v1655 = vunpack.c.h.b16 %v1256
    %v1656 = vunpack.c.l.b16 %v1257
    %v1657 = vunpack.c.h.b16 %v1257
    %v1658 = vunpack.c.l.b16 %v1258
    %v1659 = vunpack.c.h.b16 %v1258
    %v1660 = vunpack.c.l.b16 %v1259
    %v1661 = vunpack.c.h.b16 %v1259
    %v1662 = vunpack.c.l.b16 %v1260
    %v1663 = vunpack.c.h.b16 %v1260
    %v1664 = vunpack.c.l.b16 %v1261
    %v1665 = vunpack.c.h.b16 %v1261
    %v1666 = vunpack.c.l.b16 %v1262
    %v1667 = vunpack.c.h.b16 %v1262
    %v1668 = vunpack.c.l.b16 %v1263
    %v1669 = vunpack.c.h.b16 %v1263
    %v1670 = vpack.c.b16 %v1418, %v1414
    %v1671 = vpack.c.b16 %v1419, %v1415
    %v1672 = vpack.c.b16 %v1420, %v1416
    %v1673 = vpack.c.b16 %v1421, %v1417
    %v1674 = vpack.c.b16 %v1426, %v1422
    %v1675 = vpack.c.b16 %v1427, %v1423
    %v1676 = vpack.c.b16 %v1428, %v1424
    %v1677 = vpack.c.b16 %v1429, %v1425
    %v1678 = vpack.c.b16 %v1434, %v1430
    %v1679 = vpack.c.b16 %v1435, %v1431
    %v1680 = vpack.c.b16 %v1436, %v1432
    %v1681 = vpack.c.b16 %v1437, %v1433
    %v1682 = vpack.c.b16 %v1442, %v1438
    %v1683 = vpack.c.b16 %v1443, %v1439
    %v1684 = vpack.c.b16 %v1444, %v1440
    %v1685 = vpack.c.b16 %v1445, %v1441
    %v1686 = vpack.c.b16 %v1450, %v1446
    %v1687 = vpack.c.b16 %v1451, %v1447
    %v1688 = vpack.c.b16 %v1452, %v1448
    %v1689 = vpack.c.b16 %v1453, %v1449
    %v1690 = vpack.c.b16 %v1458, %v1454
    %v1691 = vpack.c.b16 %v1459, %v1455
    %v1692 = vpack.c.b16 %v1460, %v1456
    %v1693 = vpack.c.b16 %v1461, %v1457
    %v1694 = vpack.c.b16 %v1466, %v1462
    %v1695 = vpack.c.b16 %v1467, %v1463
    %v1696 = vpack.c.b16 %v1468, %v1464
    %v1697 = vpack.c.b16 %v1469, %v1465
    %v1698 = vpack.c.b16 %v1474, %v1470
    %v1699 = vpack.c.b16 %v1475, %v1471
    %v1700 = vpack.c.b16 %v1476, %v1472
    %v1701 = vpack.c.b16 %v1477, %v1473
    %v1702 = vpack.c.b16 %v1482, %v1478
    %v1703 = vpack.c.b16 %v1483, %v1479
    %v1704 = vpack.c.b16 %v1484, %v1480
    %v1705 = vpack.c.b16 %v1485, %v1481
    %v1706 = vpack.c.b16 %v1490, %v1486
    %v1707 = vpack.c.b16 %v1491, %v1487
    %v1708 = vpack.c.b16 %v1492, %v1488
    %v1709 = vpack.c.b16 %v1493, %v1489
    %v1710 = vpack.c.b16 %v1498, %v1494
    %v1711 = vpack.c.b16 %v1499, %v1495
    %v1712 = vpack.c.b16 %v1500, %v1496
    %v1713 = vpack.c.b16 %v1501, %v1497
    %v1714 = vpack.c.b16 %v1506, %v1502
    %v1715 = vpack.c.b16 %v1507, %v1503
    %v1716 = vpack.c.b16 %v1508, %v1504
    %v1717 = vpack.c.b16 %v1509, %v1505
    %v1718 = vpack.c.b16 %v1514, %v1510
    %v1719 = vpack.c.b16 %v1515, %v1511
    %v1720 = vpack.c.b16 %v1516, %v1512
    %v1721 = vpack.c.b16 %v1517, %v1513
    %v1722 = vpack.c.b16 %v1522, %v1518
    %v1723 = vpack.c.b16 %v1523, %v1519
    %v1724 = vpack.c.b16 %v1524, %v1520
    %v1725 = vpack.c.b16 %v1525, %v1521
    %v1726 = vpack.c.b16 %v1530, %v1526
    %v1727 = vpack.c.b16 %v1531, %v1527
    %v1728 = vpack.c.b16 %v1532, %v1528
    %v1729 = vpack.c.b16 %v1533, %v1529
    %v1730 = vpack.c.b16 %v1538, %v1534
    %v1731 = vpack.c.b16 %v1539, %v1535
    %v1732 = vpack.c.b16 %v1540, %v1536
    %v1733 = vpack.c.b16 %v1541, %v1537
    %v1734 = vpack.c.b16 %v1546, %v1542
    %v1735 = vpack.c.b16 %v1547, %v1543
    %v1736 = vpack.c.b16 %v1548, %v1544
    %v1737 = vpack.c.b16 %v1549, %v1545
    %v1738 = vpack.c.b16 %v1554, %v1550
    %v1739 = vpack.c.b16 %v1555, %v1551
    %v1740 = vpack.c.b16 %v1556, %v1552
    %v1741 = vpack.c.b16 %v1557, %v1553
    %v1742 = vpack.c.b16 %v1562, %v1558
    %v1743 = vpack.c.b16 %v1563, %v1559
    %v1744 = vpack.c.b16 %v1564, %v1560
    %v1745 = vpack.c.b16 %v1565, %v1561
    %v1746 = vpack.c.b16 %v1570, %v1566
    %v1747 = vpack.c.b16 %v1571, %v1567
    %v1748 = vpack.c.b16 %v1572, %v1568
    %v1749 = vpack.c.b16 %v1573, %v1569
    %v1750 = vpack.c.b16 %v1578, %v1574
    %v1751 = vpack.c.b16 %v1579, %v1575
    %v1752 = vpack.c.b16 %v1580, %v1576
    %v1753 = vpack.c.b16 %v1581, %v1577
    %v1754 = vpack.c.b16 %v1586, %v1582
    %v1755 = vpack.c.b16 %v1587, %v1583
    %v1756 = vpack.c.b16 %v1588, %v1584
    %v1757 = vpack.c.b16 %v1589, %v1585
    %v1758 = vpack.c.b16 %v1594, %v1590
    %v1759 = vpack.c.b16 %v1595, %v1591
    %v1760 = vpack.c.b16 %v1596, %v1592
    %v1761 = vpack.c.b16 %v1597, %v1593
    %v1762 = vpack.c.b16 %v1602, %v1598
    %v1763 = vpack.c.b16 %v1603, %v1599
    %v1764 = vpack.c.b16 %v1604, %v1600
    %v1765 = vpack.c.b16 %v1605, %v1601
    %v1766 = vpack.c.b16 %v1610, %v1606
    %v1767 = vpack.c.b16 %v1611, %v1607
    %v1768 = vpack.c.b16 %v1612, %v1608
    %v1769 = vpack.c.b16 %v1613, %v1609
    %v1770 = vpack.c.b16 %v1618, %v1614
    %v1771 = vpack.c.b16 %v1619, %v1615
    %v1772 = vpack.c.b16 %v1620, %v1616
    %v1773 = vpack.c.b16 %v1621, %v1617
    %v1774 = vpack.c.b16 %v1626, %v1622
    %v1775 = vpack.c.b16 %v1627, %v1623
    %v1776 = vpack.c.b16 %v1628, %v1624
    %v1777 = vpack.c.b16 %v1629, %v1625
    %v1778 = vpack.c.b16 %v1634, %v1630
    %v1779 = vpack.c.b16 %v1635, %v1631
    %v1780 = vpack.c.b16 %v1636, %v1632
    %v1781 = vpack.c.b16 %v1637, %v1633
    %v1782 = vpack.c.b16 %v1642, %v1638
    %v1783 = vpack.c.b16 %v1643, %v1639
    %v1784 = vpack.c.b16 %v1644, %v1640
    %v1785 = vpack.c.b16 %v1645, %v1641
    %v1786 = vpack.c.b16 %v1650, %v1646
    %v1787 = vpack.c.b16 %v1651, %v1647
    %v1788 = vpack.c.b16 %v1652, %v1648
    %v1789 = vpack.c.b16 %v1653, %v1649
    %v1790 = vpack.c.b16 %v1658, %v1654
    %v1791 = vpack.c.b16 %v1659, %v1655
    %v1792 = vpack.c.b16 %v1660, %v1656
    %v1793 = vpack.c.b16 %v1661, %v1657
    %v1794 = vpack.c.b16 %v1666, %v1662
    %v1795 = vpack.c.b16 %v1667, %v1663
    %v1796 = vpack.c.b16 %v1668, %v1664
    %v1797 = vpack.c.b16 %v1669, %v1665
    %1926 = vmatprep.subr.bf16.mxu0 %v1699
    %1927 = vmatpush1.bf16.msra.mxu0 %v1698
    %1928 = vmatprep.subr.bf16.mxu0 %v1695
    %1929 = vmatpush1.bf16.msra.mxu0 %v1694
    %1930 = vmatprep.subr.bf16.mxu0 %v1691
    %1931 = vmatpush1.bf16.msra.mxu0 %v1690
    %1932 = vmatprep.subr.bf16.mxu0 %v1687
    %1933 = vmatpush1.bf16.msra.mxu0 %v1686
    %1934 = vmatprep.subr.bf16.mxu0 %v1683
    %1935 = vmatpush1.bf16.msra.mxu0 %v1682
    %1936 = vmatprep.subr.bf16.mxu0 %v1679
    %1937 = vmatpush1.bf16.msra.mxu0 %v1678
    %1938 = vmatprep.subr.bf16.mxu0 %v1675
    %1939 = vmatpush1.bf16.msra.mxu0 %v1674
    %1940 = vmatprep.subr.bf16.mxu0 %v1671
    %1941 = vmatpush1.bf16.msra.mxu0 %v1670
    %1942 = vmatprep.subr.bf16.mxu0 %v1731
    %1943 = vmatpush2.bf16.msra.mxu0 %v1730
    %1944 = vmatprep.subr.bf16.mxu0 %v1727
    %1945 = vmatpush2.bf16.msra.mxu0 %v1726
    %1946 = vmatprep.subr.bf16.mxu0 %v1723
    %1947 = vmatpush2.bf16.msra.mxu0 %v1722
    %1948 = vmatprep.subr.bf16.mxu0 %v1719
    %1949 = vmatpush2.bf16.msra.mxu0 %v1718
    %1950 = vmatprep.subr.bf16.mxu0 %v1715
    %1951 = vmatpush2.bf16.msra.mxu0 %v1714
    %1952 = vmatprep.subr.bf16.mxu0 %v1711
    %1953 = vmatpush2.bf16.msra.mxu0 %v1710
    %1954 = vmatprep.subr.bf16.mxu0 %v1707
    %1955 = vmatpush2.bf16.msra.mxu0 %v1706
    %1956 = vmatprep.subr.bf16.mxu0 %v1703
    %1957 = vmatpush2.bf16.msra.mxu0 %v1702
    %1958 = vmatprep.mubr.bf16.mxu0 %v1129
    %1959 = vmatmul.mubr.bf16.gmra.mxu0 %v1128
    %v1960 = vpop.f32.mrf.mxu0
    %v1961 = vadd.f32 %v1269, %v1960
    %v1962 = vpop.f32.mrf.mxu0
    %v1963 = vadd.f32 %v1273, %v1962
    %v1964 = vpop.f32.mrf.mxu0
    %v1965 = vadd.f32 %v1269, %v1964
    %v1966 = vpop.f32.mrf.mxu0
    %v1967 = vadd.f32 %v1273, %v1966
    %1968 = vmatprep.mubr.bf16.mxu0 %v1133
    %1969 = vmatmul.mubr.bf16.gmra.mxu0 %v1132
    %v1970 = vpop.f32.mrf.mxu0
    %v1971 = vadd.f32 %v1269, %v1970
    %v1972 = vpop.f32.mrf.mxu0
    %v1973 = vadd.f32 %v1273, %v1972
    %v1974 = vpop.f32.mrf.mxu0
    %v1975 = vadd.f32 %v1269, %v1974
    %v1976 = vpop.f32.mrf.mxu0
    %v1977 = vadd.f32 %v1273, %v1976
    %1978 = vdwg.mxu0
    %1979 = vmatprep.subr.bf16.mxu0 %v1763
    %1980 = vmatpush1.bf16.msra.mxu0 %v1762
    %1981 = vmatprep.subr.bf16.mxu0 %v1759
    %1982 = vmatpush1.bf16.msra.mxu0 %v1758
    %1983 = vmatprep.subr.bf16.mxu0 %v1755
    %1984 = vmatpush1.bf16.msra.mxu0 %v1754
    %1985 = vmatprep.subr.bf16.mxu0 %v1751
    %1986 = vmatpush1.bf16.msra.mxu0 %v1750
    %1987 = vmatprep.subr.bf16.mxu0 %v1747
    %1988 = vmatpush1.bf16.msra.mxu0 %v1746
    %1989 = vmatprep.subr.bf16.mxu0 %v1743
    %1990 = vmatpush1.bf16.msra.mxu0 %v1742
    %1991 = vmatprep.subr.bf16.mxu0 %v1739
    %1992 = vmatpush1.bf16.msra.mxu0 %v1738
    %1993 = vmatprep.subr.bf16.mxu0 %v1735
    %1994 = vmatpush1.bf16.msra.mxu0 %v1734
    %1995 = vmatprep.subr.bf16.mxu0 %v1795
    %1996 = vmatpush2.bf16.msra.mxu0 %v1794
    %1997 = vmatprep.subr.bf16.mxu0 %v1791
    %1998 = vmatpush2.bf16.msra.mxu0 %v1790
    %1999 = vmatprep.subr.bf16.mxu0 %v1787
    %2000 = vmatpush2.bf16.msra.mxu0 %v1786
    %2001 = vmatprep.subr.bf16.mxu0 %v1783
    %2002 = vmatpush2.bf16.msra.mxu0 %v1782
    %2003 = vmatprep.subr.bf16.mxu0 %v1779
    %2004 = vmatpush2.bf16.msra.mxu0 %v1778
    %2005 = vmatprep.subr.bf16.mxu0 %v1775
    %2006 = vmatpush2.bf16.msra.mxu0 %v1774
    %2007 = vmatprep.subr.bf16.mxu0 %v1771
    %2008 = vmatpush2.bf16.msra.mxu0 %v1770
    %2009 = vmatprep.subr.bf16.mxu0 %v1767
    %2010 = vmatpush2.bf16.msra.mxu0 %v1766
    %2011 = vmatprep.mubr.bf16.mxu0 %v1131
    %2012 = vmatmul.mubr.bf16.gmra.mxu0 %v1130
    %v2013 = vpop.f32.mrf.mxu0
    %v2014 = vadd.f32 %v1961, %v2013
    %v2015 = vpop.f32.mrf.mxu0
    %v2016 = vadd.f32 %v1963, %v2015
    %v2017 = vpop.f32.mrf.mxu0
    %v2018 = vadd.f32 %v1965, %v2017
    %v2019 = vpop.f32.mrf.mxu0
    %v2020 = vadd.f32 %v1967, %v2019
    %2021 = vmatprep.mubr.bf16.mxu0 %v1135
    %2022 = vmatmul.mubr.bf16.gmra.mxu0 %v1134
    %v2023 = vpop.f32.mrf.mxu0
    %v2024 = vadd.f32 %v1971, %v2023
    %v2025 = vpop.f32.mrf.mxu0
    %v2026 = vadd.f32 %v1973, %v2025
    %v2027 = vpop.f32.mrf.mxu0
    %v2028 = vadd.f32 %v1975, %v2027
    %v2029 = vpop.f32.mrf.mxu0
    %v2030 = vadd.f32 %v1977, %v2029
    %2031 = vdwg.mxu0
    %2032 = vmatprep.subr.bf16.mxu0 %v1701
    %2033 = vmatpush1.bf16.msra.mxu0 %v1700
    %2034 = vmatprep.subr.bf16.mxu0 %v1697
    %2035 = vmatpush1.bf16.msra.mxu0 %v1696
    %2036 = vmatprep.subr.bf16.mxu0 %v1693
    %2037 = vmatpush1.bf16.msra.mxu0 %v1692
    %2038 = vmatprep.subr.bf16.mxu0 %v1689
    %2039 = vmatpush1.bf16.msra.mxu0 %v1688
    %2040 = vmatprep.subr.bf16.mxu0 %v1685
    %2041 = vmatpush1.bf16.msra.mxu0 %v1684
    %2042 = vmatprep.subr.bf16.mxu0 %v1681
    %2043 = vmatpush1.bf16.msra.mxu0 %v1680
    %2044 = vmatprep.subr.bf16.mxu0 %v1677
    %2045 = vmatpush1.bf16.msra.mxu0 %v1676
    %2046 = vmatprep.subr.bf16.mxu0 %v1673
    %2047 = vmatpush1.bf16.msra.mxu0 %v1672
    %2048 = vmatprep.subr.bf16.mxu0 %v1733
    %2049 = vmatpush2.bf16.msra.mxu0 %v1732
    %2050 = vmatprep.subr.bf16.mxu0 %v1729
    %2051 = vmatpush2.bf16.msra.mxu0 %v1728
    %2052 = vmatprep.subr.bf16.mxu0 %v1725
    %2053 = vmatpush2.bf16.msra.mxu0 %v1724
    %2054 = vmatprep.subr.bf16.mxu0 %v1721
    %2055 = vmatpush2.bf16.msra.mxu0 %v1720
    %2056 = vmatprep.subr.bf16.mxu0 %v1717
    %2057 = vmatpush2.bf16.msra.mxu0 %v1716
    %2058 = vmatprep.subr.bf16.mxu0 %v1713
    %2059 = vmatpush2.bf16.msra.mxu0 %v1712
    %2060 = vmatprep.subr.bf16.mxu0 %v1709
    %2061 = vmatpush2.bf16.msra.mxu0 %v1708
    %2062 = vmatprep.subr.bf16.mxu0 %v1705
    %2063 = vmatpush2.bf16.msra.mxu0 %v1704
    %2064 = vmatprep.mubr.bf16.mxu0 %v1129
    %2065 = vmatmul.mubr.bf16.gmra.mxu0 %v1128
    %v2066 = vpop.f32.mrf.mxu0
    %v2067 = vadd.f32 %v1277, %v2066
    %v2068 = vpop.f32.mrf.mxu0
    %v2069 = vadd.f32 %v1281, %v2068
    %v2070 = vpop.f32.mrf.mxu0
    %v2071 = vadd.f32 %v1277, %v2070
    %v2072 = vpop.f32.mrf.mxu0
    %v2073 = vadd.f32 %v1281, %v2072
    %2074 = vmatprep.mubr.bf16.mxu0 %v1133
    %2075 = vmatmul.mubr.bf16.gmra.mxu0 %v1132
    %v2076 = vpop.f32.mrf.mxu0
    %v2077 = vadd.f32 %v1277, %v2076
    %v2078 = vpop.f32.mrf.mxu0
    %v2079 = vadd.f32 %v1281, %v2078
    %v2080 = vpop.f32.mrf.mxu0
    %v2081 = vadd.f32 %v1277, %v2080
    %v2082 = vpop.f32.mrf.mxu0
    %v2083 = vadd.f32 %v1281, %v2082
    %2084 = vdwg.mxu0
    %2085 = vmatprep.subr.bf16.mxu0 %v1765
    %2086 = vmatpush1.bf16.msra.mxu0 %v1764
    %2087 = vmatprep.subr.bf16.mxu0 %v1761
    %2088 = vmatpush1.bf16.msra.mxu0 %v1760
    %2089 = vmatprep.subr.bf16.mxu0 %v1757
    %2090 = vmatpush1.bf16.msra.mxu0 %v1756
    %2091 = vmatprep.subr.bf16.mxu0 %v1753
    %2092 = vmatpush1.bf16.msra.mxu0 %v1752
    %2093 = vmatprep.subr.bf16.mxu0 %v1749
    %2094 = vmatpush1.bf16.msra.mxu0 %v1748
    %2095 = vmatprep.subr.bf16.mxu0 %v1745
    %2096 = vmatpush1.bf16.msra.mxu0 %v1744
    %2097 = vmatprep.subr.bf16.mxu0 %v1741
    %2098 = vmatpush1.bf16.msra.mxu0 %v1740
    %2099 = vmatprep.subr.bf16.mxu0 %v1737
    %2100 = vmatpush1.bf16.msra.mxu0 %v1736
    %2101 = vmatprep.subr.bf16.mxu0 %v1797
    %2102 = vmatpush2.bf16.msra.mxu0 %v1796
    %2103 = vmatprep.subr.bf16.mxu0 %v1793
    %2104 = vmatpush2.bf16.msra.mxu0 %v1792
    %2105 = vmatprep.subr.bf16.mxu0 %v1789
    %2106 = vmatpush2.bf16.msra.mxu0 %v1788
    %2107 = vmatprep.subr.bf16.mxu0 %v1785
    %2108 = vmatpush2.bf16.msra.mxu0 %v1784
    %2109 = vmatprep.subr.bf16.mxu0 %v1781
    %2110 = vmatpush2.bf16.msra.mxu0 %v1780
    %2111 = vmatprep.subr.bf16.mxu0 %v1777
    %2112 = vmatpush2.bf16.msra.mxu0 %v1776
    %2113 = vmatprep.subr.bf16.mxu0 %v1773
    %2114 = vmatpush2.bf16.msra.mxu0 %v1772
    %2115 = vmatprep.subr.bf16.mxu0 %v1769
    %2116 = vmatpush2.bf16.msra.mxu0 %v1768
    %2117 = vmatprep.mubr.bf16.mxu0 %v1131
    %2118 = vmatmul.mubr.bf16.gmra.mxu0 %v1130
    %v2119 = vpop.f32.mrf.mxu0
    %v2120 = vadd.f32 %v2067, %v2119
    %v2121 = vpop.f32.mrf.mxu0
    %v2122 = vadd.f32 %v2069, %v2121
    %v2123 = vpop.f32.mrf.mxu0
    %v2124 = vadd.f32 %v2071, %v2123
    %v2125 = vpop.f32.mrf.mxu0
    %v2126 = vadd.f32 %v2073, %v2125
    %2127 = vmatprep.mubr.bf16.mxu0 %v1135
    %2128 = vmatmul.mubr.bf16.gmra.mxu0 %v1134
    %v2129 = vpop.f32.mrf.mxu0
    %v2130 = vadd.f32 %v2077, %v2129
    %v2131 = vpop.f32.mrf.mxu0
    %v2132 = vadd.f32 %v2079, %v2131
    %v2133 = vpop.f32.mrf.mxu0
    %v2134 = vadd.f32 %v2081, %v2133
    %v2135 = vpop.f32.mrf.mxu0
    %v2136 = vadd.f32 %v2083, %v2135
    %2137 = vdwg.mxu0
    %v2138 = vpack.c.bf16 %v2018, %v2014
    %v2139 = vpack.c.bf16 %v2020, %v2016
    %v2140 = vpack.c.bf16 %v2124, %v2120
    %v2141 = vpack.c.bf16 %v2126, %v2122
    %v2142 = vpack.c.bf16 %v2028, %v2024
    %v2143 = vpack.c.bf16 %v2030, %v2026
    %v2144 = vpack.c.bf16 %v2134, %v2130
    %v2145 = vpack.c.bf16 %v2136, %v2132
    %v2146 = vmax.bf16 %v2138, 0
    %v2147 = vmax.bf16 %v2139, 0
    %v2148 = vmax.bf16 %v2140, 0
    %v2149 = vmax.bf16 %v2141, 0
    %v2150 = vmax.bf16 %v2142, 0
    %v2151 = vmax.bf16 %v2143, 0
    %v2152 = vmax.bf16 %v2144, 0
    %v2153 = vmax.bf16 %v2145, 0
    %v2154 = vld [vmem:[#allocation10] sm:$0xf]
    %v2155 = vld [vmem:[#allocation10 + $0x4] sm:$0xf]
    %v2156 = vld [vmem:[#allocation10 + $0x8] sm:$0xf]
    %v2157 = vld [vmem:[#allocation10 + $0xc] sm:$0xf]
    %v2158 = vld [vmem:[#allocation10 + $0x10] sm:$0xf]
    %v2159 = vld [vmem:[#allocation10 + $0x14] sm:$0xf]
    %v2160 = vld [vmem:[#allocation10 + $0x18] sm:$0xf]
    %v2161 = vld [vmem:[#allocation10 + $0x1c] sm:$0xf]
    %v2162 = vld [vmem:[#allocation10 + $0x20] sm:$0xf]
    %v2163 = vld [vmem:[#allocation10 + $0x24] sm:$0xf]
    %v2164 = vld [vmem:[#allocation10 + $0x28] sm:$0xf]
    %v2165 = vld [vmem:[#allocation10 + $0x2c] sm:$0xf]
    %v2166 = vld [vmem:[#allocation10 + $0x30] sm:$0xf]
    %v2167 = vld [vmem:[#allocation10 + $0x34] sm:$0xf]
    %v2168 = vld [vmem:[#allocation10 + $0x38] sm:$0xf]
    %v2169 = vld [vmem:[#allocation10 + $0x3c] sm:$0xf]
    %v2170 = vld [vmem:[#allocation10 + $0x40] sm:$0xf]
    %v2171 = vld [vmem:[#allocation10 + $0x44] sm:$0xf]
    %v2172 = vld [vmem:[#allocation10 + $0x48] sm:$0xf]
    %v2173 = vld [vmem:[#allocation10 + $0x4c] sm:$0xf]
    %v2174 = vld [vmem:[#allocation10 + $0x50] sm:$0xf]
    %v2175 = vld [vmem:[#allocation10 + $0x54] sm:$0xf]
    %v2176 = vld [vmem:[#allocation10 + $0x58] sm:$0xf]
    %v2177 = vld [vmem:[#allocation10 + $0x5c] sm:$0xf]
    %v2178 = vld [vmem:[#allocation10 + $0x60] sm:$0xf]
    %v2179 = vld [vmem:[#allocation10 + $0x64] sm:$0xf]
    %v2180 = vld [vmem:[#allocation10 + $0x68] sm:$0xf]
    %v2181 = vld [vmem:[#allocation10 + $0x6c] sm:$0xf]
    %v2182 = vld [vmem:[#allocation10 + $0x70] sm:$0xf]
    %v2183 = vld [vmem:[#allocation10 + $0x74] sm:$0xf]
    %v2184 = vld [vmem:[#allocation10 + $0x78] sm:$0xf]
    %v2185 = vld [vmem:[#allocation10 + $0x7c] sm:$0xf]
    %v2186 = vld [vmem:[#allocation10 + $0x80] sm:$0xf]
    %v2187 = vld [vmem:[#allocation10 + $0x84] sm:$0xf]
    %v2188 = vld [vmem:[#allocation10 + $0x88] sm:$0xf]
    %v2189 = vld [vmem:[#allocation10 + $0x8c] sm:$0xf]
    %v2190 = vld [vmem:[#allocation10 + $0x90] sm:$0xf]
    %v2191 = vld [vmem:[#allocation10 + $0x94] sm:$0xf]
    %v2192 = vld [vmem:[#allocation10 + $0x98] sm:$0xf]
    %v2193 = vld [vmem:[#allocation10 + $0x9c] sm:$0xf]
    %v2194 = vld [vmem:[#allocation10 + $0xa0] sm:$0xf]
    %v2195 = vld [vmem:[#allocation10 + $0xa4] sm:$0xf]
    %v2196 = vld [vmem:[#allocation10 + $0xa8] sm:$0xf]
    %v2197 = vld [vmem:[#allocation10 + $0xac] sm:$0xf]
    %v2198 = vld [vmem:[#allocation10 + $0xb0] sm:$0xf]
    %v2199 = vld [vmem:[#allocation10 + $0xb4] sm:$0xf]
    %v2200 = vld [vmem:[#allocation10 + $0xb8] sm:$0xf]
    %v2201 = vld [vmem:[#allocation10 + $0xbc] sm:$0xf]
    %v2202 = vld [vmem:[#allocation10 + $0xc0] sm:$0xf]
    %v2203 = vld [vmem:[#allocation10 + $0xc4] sm:$0xf]
    %v2204 = vld [vmem:[#allocation10 + $0xc8] sm:$0xf]
    %v2205 = vld [vmem:[#allocation10 + $0xcc] sm:$0xf]
    %v2206 = vld [vmem:[#allocation10 + $0xd0] sm:$0xf]
    %v2207 = vld [vmem:[#allocation10 + $0xd4] sm:$0xf]
    %v2208 = vld [vmem:[#allocation10 + $0xd8] sm:$0xf]
    %v2209 = vld [vmem:[#allocation10 + $0xdc] sm:$0xf]
    %v2210 = vld [vmem:[#allocation10 + $0xe0] sm:$0xf]
    %v2211 = vld [vmem:[#allocation10 + $0xe4] sm:$0xf]
    %v2212 = vld [vmem:[#allocation10 + $0xe8] sm:$0xf]
    %v2213 = vld [vmem:[#allocation10 + $0xec] sm:$0xf]
    %v2214 = vld [vmem:[#allocation10 + $0xf0] sm:$0xf]
    %v2215 = vld [vmem:[#allocation10 + $0xf4] sm:$0xf]
    %v2216 = vld [vmem:[#allocation10 + $0xf8] sm:$0xf]
    %v2217 = vld [vmem:[#allocation10 + $0xfc] sm:$0xf]
    %v2218 = vld [vmem:[%s6] sm:$0x1]
    %v2220 = vlaneseq
    %v2221 = vshrl.u32 %v2220, 7
    %v2222 = vsub.s32 0, %v2221
    %v2223 = vrot.slane %v2218, %v2222
    %v2289 = vunpack.c.l.b16 %v2154
    %v2290 = vunpack.c.l.b16 %v2155
    %v2291 = vunpack.c.l.b16 %v2156
    %v2292 = vunpack.c.l.b16 %v2157
    %v2293 = vunpack.c.l.b16 %v2158
    %v2294 = vunpack.c.l.b16 %v2159
    %v2295 = vunpack.c.l.b16 %v2160
    %v2296 = vunpack.c.l.b16 %v2161
    %v2297 = vunpack.c.l.b16 %v2162
    %v2298 = vunpack.c.l.b16 %v2163
    %v2299 = vunpack.c.l.b16 %v2164
    %v2300 = vunpack.c.l.b16 %v2165
    %v2301 = vunpack.c.l.b16 %v2166
    %v2302 = vunpack.c.l.b16 %v2167
    %v2303 = vunpack.c.l.b16 %v2168
    %v2304 = vunpack.c.l.b16 %v2169
    %v2305 = vunpack.c.l.b16 %v2170
    %v2306 = vunpack.c.l.b16 %v2171
    %v2307 = vunpack.c.l.b16 %v2172
    %v2308 = vunpack.c.l.b16 %v2173
    %v2309 = vunpack.c.l.b16 %v2174
    %v2310 = vunpack.c.l.b16 %v2175
    %v2311 = vunpack.c.l.b16 %v2176
    %v2312 = vunpack.c.l.b16 %v2177
    %v2313 = vunpack.c.l.b16 %v2178
    %v2314 = vunpack.c.l.b16 %v2179
    %v2315 = vunpack.c.l.b16 %v2180
    %v2316 = vunpack.c.l.b16 %v2181
    %v2317 = vunpack.c.l.b16 %v2182
    %v2318 = vunpack.c.l.b16 %v2183
    %v2319 = vunpack.c.l.b16 %v2184
    %v2320 = vunpack.c.l.b16 %v2185
    %v2321 = vunpack.c.l.b16 %v2186
    %v2322 = vunpack.c.l.b16 %v2187
    %v2323 = vunpack.c.l.b16 %v2188
    %v2324 = vunpack.c.l.b16 %v2189
    %v2325 = vunpack.c.l.b16 %v2190
    %v2326 = vunpack.c.l.b16 %v2191
    %v2327 = vunpack.c.l.b16 %v2192
    %v2328 = vunpack.c.l.b16 %v2193
    %v2329 = vunpack.c.l.b16 %v2194
    %v2330 = vunpack.c.l.b16 %v2195
    %v2331 = vunpack.c.l.b16 %v2196
    %v2332 = vunpack.c.l.b16 %v2197
    %v2333 = vunpack.c.l.b16 %v2198
    %v2334 = vunpack.c.l.b16 %v2199
    %v2335 = vunpack.c.l.b16 %v2200
    %v2336 = vunpack.c.l.b16 %v2201
    %v2337 = vunpack.c.l.b16 %v2202
    %v2338 = vunpack.c.l.b16 %v2203
    %v2339 = vunpack.c.l.b16 %v2204
    %v2340 = vunpack.c.l.b16 %v2205
    %v2341 = vunpack.c.l.b16 %v2206
    %v2342 = vunpack.c.l.b16 %v2207
    %v2343 = vunpack.c.l.b16 %v2208
    %v2344 = vunpack.c.l.b16 %v2209
    %v2345 = vunpack.c.l.b16 %v2210
    %v2346 = vunpack.c.l.b16 %v2211
    %v2347 = vunpack.c.l.b16 %v2212
    %v2348 = vunpack.c.l.b16 %v2213
    %v2349 = vunpack.c.l.b16 %v2214
    %v2350 = vunpack.c.l.b16 %v2215
    %v2351 = vunpack.c.l.b16 %v2216
    %v2352 = vunpack.c.l.b16 %v2217
    %v2353 = vpack.c.b16 %v2290, %v2289
    %v2354 = vpack.c.b16 %v2292, %v2291
    %v2355 = vpack.c.b16 %v2294, %v2293
    %v2356 = vpack.c.b16 %v2296, %v2295
    %v2357 = vpack.c.b16 %v2298, %v2297
    %v2358 = vpack.c.b16 %v2300, %v2299
    %v2359 = vpack.c.b16 %v2302, %v2301
    %v2360 = vpack.c.b16 %v2304, %v2303
    %v2361 = vpack.c.b16 %v2306, %v2305
    %v2362 = vpack.c.b16 %v2308, %v2307
    %v2363 = vpack.c.b16 %v2310, %v2309
    %v2364 = vpack.c.b16 %v2312, %v2311
    %v2365 = vpack.c.b16 %v2314, %v2313
    %v2366 = vpack.c.b16 %v2316, %v2315
    %v2367 = vpack.c.b16 %v2318, %v2317
    %v2368 = vpack.c.b16 %v2320, %v2319
    %v2369 = vpack.c.b16 %v2322, %v2321
    %v2370 = vpack.c.b16 %v2324, %v2323
    %v2371 = vpack.c.b16 %v2326, %v2325
    %v2372 = vpack.c.b16 %v2328, %v2327
    %v2373 = vpack.c.b16 %v2330, %v2329
    %v2374 = vpack.c.b16 %v2332, %v2331
    %v2375 = vpack.c.b16 %v2334, %v2333
    %v2376 = vpack.c.b16 %v2336, %v2335
    %v2377 = vpack.c.b16 %v2338, %v2337
    %v2378 = vpack.c.b16 %v2340, %v2339
    %v2379 = vpack.c.b16 %v2342, %v2341
    %v2380 = vpack.c.b16 %v2344, %v2343
    %v2381 = vpack.c.b16 %v2346, %v2345
    %v2382 = vpack.c.b16 %v2348, %v2347
    %v2383 = vpack.c.b16 %v2350, %v2349
    %v2384 = vpack.c.b16 %v2352, %v2351
    %2417 = vmatprep.subr.bf16.mxu0 0
    %2418 = vmatpush1.bf16.msra.mxu0 %v2360
    %2419 = vmatprep.subr.bf16.mxu0 0
    %2420 = vmatpush1.bf16.msra.mxu0 %v2359
    %2421 = vmatprep.subr.bf16.mxu0 0
    %2422 = vmatpush1.bf16.msra.mxu0 %v2358
    %2423 = vmatprep.subr.bf16.mxu0 0
    %2424 = vmatpush1.bf16.msra.mxu0 %v2357
    %2425 = vmatprep.subr.bf16.mxu0 0
    %2426 = vmatpush1.bf16.msra.mxu0 %v2356
    %2427 = vmatprep.subr.bf16.mxu0 0
    %2428 = vmatpush1.bf16.msra.mxu0 %v2355
    %2429 = vmatprep.subr.bf16.mxu0 0
    %2430 = vmatpush1.bf16.msra.mxu0 %v2354
    %2431 = vmatprep.subr.bf16.mxu0 0
    %2432 = vmatpush1.bf16.msra.mxu0 %v2353
    %2433 = vmatprep.subr.bf16.mxu0 0
    %2434 = vmatpush2.bf16.msra.mxu0 %v2368
    %2435 = vmatprep.subr.bf16.mxu0 0
    %2436 = vmatpush2.bf16.msra.mxu0 %v2367
    %2437 = vmatprep.subr.bf16.mxu0 0
    %2438 = vmatpush2.bf16.msra.mxu0 %v2366
    %2439 = vmatprep.subr.bf16.mxu0 0
    %2440 = vmatpush2.bf16.msra.mxu0 %v2365
    %2441 = vmatprep.subr.bf16.mxu0 0
    %2442 = vmatpush2.bf16.msra.mxu0 %v2364
    %2443 = vmatprep.subr.bf16.mxu0 0
    %2444 = vmatpush2.bf16.msra.mxu0 %v2363
    %2445 = vmatprep.subr.bf16.mxu0 0
    %2446 = vmatpush2.bf16.msra.mxu0 %v2362
    %2447 = vmatprep.subr.bf16.mxu0 0
    %2448 = vmatpush2.bf16.msra.mxu0 %v2361
    %2449 = vmatprep.mubr.bf16.mxu0 %v2147
    %2450 = vmatmul.mubr.bf16.gmra.mxu0 %v2146
    %v2451 = vpop.f32.mrf.mxu0
    %v2452 = vadd.f32 %v2223, %v2451
    %v2453 = vpop.f32.mrf.mxu0
    %v2454 = vpop.f32.mrf.mxu0
    %v2455 = vadd.f32 %v2223, %v2454
    %v2456 = vpop.f32.mrf.mxu0
    %2457 = vmatprep.mubr.bf16.mxu0 %v2151
    %2458 = vmatmul.mubr.bf16.gmra.mxu0 %v2150
    %v2459 = vpop.f32.mrf.mxu0
    %v2460 = vadd.f32 %v2223, %v2459
    %v2461 = vpop.f32.mrf.mxu0
    %v2462 = vpop.f32.mrf.mxu0
    %v2463 = vadd.f32 %v2223, %v2462
    %v2464 = vpop.f32.mrf.mxu0
    %2465 = vdwg.mxu0
    %2466 = vmatprep.subr.bf16.mxu0 0
    %2467 = vmatpush1.bf16.msra.mxu0 %v2376
    %2468 = vmatprep.subr.bf16.mxu0 0
    %2469 = vmatpush1.bf16.msra.mxu0 %v2375
    %2470 = vmatprep.subr.bf16.mxu0 0
    %2471 = vmatpush1.bf16.msra.mxu0 %v2374
    %2472 = vmatprep.subr.bf16.mxu0 0
    %2473 = vmatpush1.bf16.msra.mxu0 %v2373
    %2474 = vmatprep.subr.bf16.mxu0 0
    %2475 = vmatpush1.bf16.msra.mxu0 %v2372
    %2476 = vmatprep.subr.bf16.mxu0 0
    %2477 = vmatpush1.bf16.msra.mxu0 %v2371
    %2478 = vmatprep.subr.bf16.mxu0 0
    %2479 = vmatpush1.bf16.msra.mxu0 %v2370
    %2480 = vmatprep.subr.bf16.mxu0 0
    %2481 = vmatpush1.bf16.msra.mxu0 %v2369
    %2482 = vmatprep.subr.bf16.mxu0 0
    %2483 = vmatpush2.bf16.msra.mxu0 %v2384
    %2484 = vmatprep.subr.bf16.mxu0 0
    %2485 = vmatpush2.bf16.msra.mxu0 %v2383
    %2486 = vmatprep.subr.bf16.mxu0 0
    %2487 = vmatpush2.bf16.msra.mxu0 %v2382
    %2488 = vmatprep.subr.bf16.mxu0 0
    %2489 = vmatpush2.bf16.msra.mxu0 %v2381
    %2490 = vmatprep.subr.bf16.mxu0 0
    %2491 = vmatpush2.bf16.msra.mxu0 %v2380
    %2492 = vmatprep.subr.bf16.mxu0 0
    %2493 = vmatpush2.bf16.msra.mxu0 %v2379
    %2494 = vmatprep.subr.bf16.mxu0 0
    %2495 = vmatpush2.bf16.msra.mxu0 %v2378
    %2496 = vmatprep.subr.bf16.mxu0 0
    %2497 = vmatpush2.bf16.msra.mxu0 %v2377
    %2498 = vmatprep.mubr.bf16.mxu0 %v2149
    %2499 = vmatmul.mubr.bf16.gmra.mxu0 %v2148
    %v2500 = vpop.f32.mrf.mxu0
    %v2501 = vadd.f32 %v2452, %v2500
    %v2502 = vpop.f32.mrf.mxu0
    %v2503 = vpop.f32.mrf.mxu0
    %v2504 = vadd.f32 %v2455, %v2503
    %v2505 = vpop.f32.mrf.mxu0
    %2506 = vmatprep.mubr.bf16.mxu0 %v2153
    %2507 = vmatmul.mubr.bf16.gmra.mxu0 %v2152
    %v2508 = vpop.f32.mrf.mxu0
    %v2509 = vadd.f32 %v2460, %v2508
    %v2510 = vpop.f32.mrf.mxu0
    %v2511 = vpop.f32.mrf.mxu0
    %v2512 = vadd.f32 %v2463, %v2511
    %v2513 = vpop.f32.mrf.mxu0
    %2514 = vdwg.mxu0
    %2515 = vst [vmem:[#allocation11] sm:$0xff] %v2501
    %2516 = vst [vmem:[#allocation11 + $0x8] sm:$0xff] %v2504
    %2517 = vst [vmem:[#allocation11 + $0x10] sm:$0xff] %v2509
    %2518 = vst [vmem:[#allocation11 + $0x18] sm:$0xff] %v2512
    // Predicated region
    $region50: #{tpu_custom_call.1} parent=1 // pred_check
      _
    $region51: #{tpu_custom_call.1} parent=1 // pred_check_branch
      %2520 = sbr.rel (0) target = $region53
    $region52: #{tpu_custom_call.1} parent=1 // pred_region
      %s2522 = ssub.s32 512, 512
      %2523 = vsyncadd [#allocation4], %s2522
      %s2524 = sshll.u32 [#allocation11], 4
      %s2525 = int_to_ptr.vmem [resolvable:$true] %s2524
      %2530 = dma.vmem_to_hbm [thread:$0]  %s2525, 512, %s7, [#allocation4], 128, 128, 8
    $region53: #{tpu_custom_call.1} parent=1 // pred_fallthru
      _
    // Predicated region
    $region54: #{tpu_custom_call.1} parent=1 // pred_check
      _
    $region55: #{tpu_custom_call.1} parent=1 // pred_check_branch
      %2532 = sbr.rel (0) target = $region57
    $region56: #{tpu_custom_call.1} parent=1 // pred_region
      %2533 = dma.done [#allocation4], 512
    $region57: #{tpu_custom_call.1} parent=1 // pred_fallthru
      _
    %2534 = vsyncpa [#allocation3], 1
    %2535 = vsyncpa [#allocation6], 1
    %2536 = vsyncpa [#allocation9], 1
    %2537 = vsyncpa [#allocation4], 1

</llo_original>
